<compile_context>
chip_gen: v5e
topology: v5e:2x2
jax: 0.10.0
libtpu: 0.0.40
codegen_flags: <defaults>
</compile_context>

<pallas_src>
from functools import partial

import numpy as np
import jax
import jax.numpy as jnp
from jax.experimental import pallas as pl
from jax.experimental.pallas import tpu as pltpu

# Keep the per-kernel working set well inside v7x's 64 MiB physical VMEM.
_VMEM_LIMIT = 48 * 1024 * 1024


def _round_up(v, m):
    return -(-v // m) * m


# ----------------------------------------------------------------------------- #
# Pallas kernel 1: matmul with fused per-channel scale/bias (+ ReLU)
#   bf16 operands -> MXU, f32 accumulate/epilogue, bf16 output.
# ----------------------------------------------------------------------------- #
def _mm_kernel(x_ref, w_ref, s_ref, b_ref, o_ref, *, relu):
    y = jnp.dot(x_ref[...], w_ref[...], preferred_element_type=jnp.float32)
    y = y * s_ref[...] + b_ref[...]
    if relu:
        y = jnp.maximum(y, 0.0)
    o_ref[...] = y.astype(o_ref.dtype)


def _pick_tm(M, K, N):
    """Row-tile size: ~6 MiB of (bf16 in + bf16 out + f32 accum) per step, balanced."""
    bytes_per_row = 2 * K + 6 * N
    tm = max(256, min(8192, (6 * 1024 * 1024) // bytes_per_row))
    nb = -(-M // tm)                 # number of row blocks
    rows = -(-M // nb)               # balance so the tail block is nearly full
    return _round_up(rows, 8)


def _pick_tn(N, m_blocks):
    """Split N when the M grid would collapse to a single step (v7x megacore)."""
    if m_blocks > 1 or N < 256:
        return N
    for cand in range((N // 128) * 128, 127, -128):
        if cand < N and N % cand == 0:
            return cand
    return N


@partial(jax.jit, static_argnames=("relu",))
def matmul_scale_bias_act(x, w, scale, bias, relu=True):
    """out = act( (x @ w) * scale + bias ), x:[M,K], w:[K,N], scale/bias:[N] -> bf16."""
    M, K = x.shape
    _, N = w.shape
    tm = _pick_tm(M, K, N)
    Mp = _round_up(M, tm)
    tn = _pick_tn(N, Mp // tm)

    xb = x.astype(jnp.bfloat16)
    if Mp != M:                       # pad fuses with the bf16 cast (single pass)
        xb = jnp.pad(xb, ((0, Mp - M), (0, 0)))
    wb = w.astype(jnp.bfloat16)
    s2 = scale.astype(jnp.float32).reshape(1, N)
    b2 = bias.astype(jnp.float32).reshape(1, N)

    cost = pl.CostEstimate(flops=2 * M * K * N, transcendentals=0,
                           bytes_accessed=Mp * K * 2 + K * N * 2 + Mp * N * 2)

    out = pl.pallas_call(
        partial(_mm_kernel, relu=relu),
        out_shape=jax.ShapeDtypeStruct((Mp, N), jnp.bfloat16),
        grid_spec=pltpu.PrefetchScalarGridSpec(
            num_scalar_prefetch=0,
            grid=(Mp // tm, N // tn),
            in_specs=[
                pl.BlockSpec((tm, K), lambda i, j: (i, 0)),
                pl.BlockSpec((K, tn), lambda i, j: (0, j)),
                pl.BlockSpec((1, tn), lambda i, j: (0, j)),
                pl.BlockSpec((1, tn), lambda i, j: (0, j)),
            ],
            out_specs=pl.BlockSpec((tm, tn), lambda i, j: (i, j)),
        ),
        compiler_params=pltpu.CompilerParams(
            dimension_semantics=("parallel", "parallel"),
            vmem_limit_bytes=_VMEM_LIMIT),
        cost_estimate=cost,
    )(xb, wb, s2, b2)
    return out[:M] if Mp != M else out


# ----------------------------------------------------------------------------- #
# Pallas kernel 2: fused stride-1 Conv2d + BN scale/bias + ReLU (in-VMEM im2col)
#   Input is the zero-padded image, width-padded to a multiple of 8 and row-
#   flattened in HBM ([(Hp+1)*wpad, Cin]); the kernel accumulates kh*kw shifted
#   flat sub-matmuls into an f32 accumulator, then stores a bf16 [TH, Wo, Cout]
#   row tile.  No HBM patch tensor is ever materialized.
# ----------------------------------------------------------------------------- #
def _conv_kernel(x_ref, w_ref, s_ref, b_ref, o_ref, *, kh, kw, wpad, relu):
    TH = o_ref.shape[1]
    Wo = o_ref.shape[2]
    m = TH * wpad
    h0 = pl.program_id(1) * TH
    acc = None
    for i in range(kh):
        for j in range(kw):
            lhs = x_ref[0, pl.ds((h0 + i) * wpad + j, m), :]     # [TH*wpad, Cin]
            y = jnp.dot(lhs, w_ref[i * kw + j],
                        preferred_element_type=jnp.float32)      # [TH*wpad, Cout]
            acc = y if acc is None else acc + y
    acc = acc * s_ref[...] + b_ref[...]
    if relu:
        acc = jnp.maximum(acc, 0.0)
    acc = acc.reshape(TH, wpad, acc.shape[-1])                   # aligned split
    o_ref[0] = acc[:, :Wo, :].astype(o_ref.dtype)                # drop pad columns


def _pick_th(Ho, wpad, cout):
    """Largest divisor of Ho keeping the f32 accumulator tile around <=2.5 MiB."""
    limit = max(1, 2_500_000 // (wpad * cout * 4))
    best = 1
    for d in range(1, Ho + 1):
        if Ho % d == 0 and d <= limit:
            best = d
    if best == 1:          # e.g. prime Ho: take the whole map (still fits VMEM here)
        best = Ho
    return best


@partial(jax.jit, static_argnames=("padding",))
def conv2d_fused(x, w, scale, bias, *, padding):
    """Stride-1 BasicConv2d (Conv + BN(eval) + ReLU), NHWC bf16 in/out."""
    B, H, W, Cin = x.shape
    kh, kw, _, Cout = w.shape
    ph, pw = padding
    Ho = H + 2 * ph - kh + 1
    Wo = W + 2 * pw - kw + 1
    Hp = H + 2 * ph
    wpad = _round_up(W + 2 * pw, 8)
    # conv padding + right pad to a multiple of 8 + one spare bottom row so the
    # last tap's full-width flat slice stays inside the block.
    xp = jnp.pad(x.astype(jnp.bfloat16),
                 ((0, 0), (ph, ph + 1), (pw, wpad - W - pw), (0, 0)))
    xf = xp.reshape(B, (Hp + 1) * wpad, Cin)           # free row-major reshape
    w3 = w.astype(jnp.bfloat16).reshape(kh * kw, Cin, Cout)
    s2 = scale.astype(jnp.float32).reshape(1, Cout)
    b2 = bias.astype(jnp.float32).reshape(1, Cout)
    TH = _pick_th(Ho, wpad, Cout)

    cost = pl.CostEstimate(
        flops=2 * B * Ho * wpad * kh * kw * Cin * Cout,
        transcendentals=0,
        bytes_accessed=xf.size * 2 + w3.size * 2 + B * Ho * Wo * Cout * 2)

    return pl.pallas_call(
        partial(_conv_kernel, kh=kh, kw=kw, wpad=wpad, relu=True),
        out_shape=jax.ShapeDtypeStruct((B, Ho, Wo, Cout), jnp.bfloat16),
        grid_spec=pltpu.PrefetchScalarGridSpec(
            num_scalar_prefetch=0,
            grid=(B, Ho // TH),
            in_specs=[
                pl.BlockSpec((1, (Hp + 1) * wpad, Cin), lambda b, t: (b, 0, 0)),
                pl.BlockSpec((kh * kw, Cin, Cout), lambda b, t: (0, 0, 0)),
                pl.BlockSpec((1, Cout), lambda b, t: (0, 0)),
                pl.BlockSpec((1, Cout), lambda b, t: (0, 0)),
            ],
            out_specs=pl.BlockSpec((1, TH, Wo, Cout), lambda b, t: (b, t, 0, 0)),
        ),
        compiler_params=pltpu.CompilerParams(
            dimension_semantics=("parallel", "parallel"),
            vmem_limit_bytes=_VMEM_LIMIT),
        cost_estimate=cost,
    )(xf, w3, s2, b2)


# ----------------------------------------------------------------------------- #
# Pallas kernel 3: fused 3x3 stride-1 pad-1 average pooling (count_include_pad)
#   Separable: 3 H-shifted ref reads summed in f32, then 3 W-shifted value slices.
# ----------------------------------------------------------------------------- #
def _avg3x3_kernel(x_ref, o_ref):
    H, W = o_ref.shape[1], o_ref.shape[2]
    t = (x_ref[0, 0:H, :, :].astype(jnp.float32)
         + x_ref[0, 1:H + 1, :, :].astype(jnp.float32)
         + x_ref[0, 2:H + 2, :, :].astype(jnp.float32))          # [H, W+2, C]
    acc = t[:, 0:W, :] + t[:, 1:W + 1, :] + t[:, 2:W + 2, :]
    o_ref[0] = (acc * (1.0 / 9.0)).astype(o_ref.dtype)


@jax.jit
def avg_pool_3x3_s1_p1(x):
    """F.avg_pool2d(x, 3, stride=1, padding=1) with count_include_pad=True (NHWC)."""
    B, H, W, C = x.shape
    xp = jnp.pad(x, ((0, 0), (1, 1), (1, 1), (0, 0)))
    if C <= 1024:
        ct = C
    elif C % 512 == 0:
        ct = 512
    elif C % 256 == 0:
        ct = 256
    elif C % 128 == 0:
        ct = 128
    else:
        ct = C
    return pl.pallas_call(
        _avg3x3_kernel,
        out_shape=jax.ShapeDtypeStruct((B, H, W, C), x.dtype),
        grid_spec=pltpu.PrefetchScalarGridSpec(
            num_scalar_prefetch=0,
            grid=(B, C // ct),
            in_specs=[pl.BlockSpec((1, H + 2, W + 2, ct),
                                   lambda b, c: (b, 0, 0, c))],
            out_specs=pl.BlockSpec((1, H, W, ct), lambda b, c: (b, 0, 0, c)),
        ),
        compiler_params=pltpu.CompilerParams(
            dimension_semantics=("parallel", "parallel"),
            vmem_limit_bytes=_VMEM_LIMIT),
    )(xp)


# ----------------------------------------------------------------------------- #
# Pallas kernel 4: fused 3x3 stride-2 max pooling (no HBM patch tensor)
#   Even/odd rows are folded into the W axis and even/odd columns into the
#   channel axis by free HBM reshapes, so the kernel only needs plain slices.
# ----------------------------------------------------------------------------- #
def _max3x3s2_kernel(x_ref, o_ref):
    Ho, Wo, C = o_ref.shape[1], o_ref.shape[2], o_ref.shape[3]
    WW = Wo + 1
    a = x_ref[0, 0:Ho, 0:WW, :]            # rows 2h   , col pairs (even|odd in C)
    b = x_ref[0, 0:Ho, WW:2 * WW, :]       # rows 2h+1
    c = x_ref[0, 1:Ho + 1, 0:WW, :]        # rows 2h+2
    t = jnp.maximum(jnp.maximum(a, b), c)  # [Ho, WW, 2C]
    te, to = t[:, :, 0:C], t[:, :, C:2 * C]
    out = jnp.maximum(jnp.maximum(te[:, 0:Wo, :], to[:, 0:Wo, :]),
                      te[:, 1:WW, :])
    o_ref[0] = out.astype(o_ref.dtype)


@jax.jit
def max_pool_3x3_s2(x):
    """nn.MaxPool2d(kernel_size=3, stride=2) on NHWC."""
    B, H, W, C = x.shape
    Ho = (H - 3) // 2 + 1
    Wo = (W - 3) // 2 + 1
    HH, WW = Ho + 1, Wo + 1
    xp = jnp.pad(x, ((0, 0), (0, 2 * HH - H), (0, 2 * WW - W), (0, 0)))
    # fold W pairs into channels, then H pairs into W (free row-major reshapes)
    xr = xp.reshape(B, 2 * HH, WW, 2 * C).reshape(B, HH, 2 * WW, 2 * C)
    return pl.pallas_call(
        _max3x3s2_kernel,
        out_shape=jax.ShapeDtypeStruct((B, Ho, Wo, C), x.dtype),
        grid_spec=pltpu.PrefetchScalarGridSpec(
            num_scalar_prefetch=0,
            grid=(B,),
            in_specs=[pl.BlockSpec((1, HH, 2 * WW, 2 * C),
                                   lambda b: (b, 0, 0, 0))],
            out_specs=pl.BlockSpec((1, Ho, Wo, C), lambda b: (b, 0, 0, 0)),
        ),
        compiler_params=pltpu.CompilerParams(
            dimension_semantics=("parallel",),
            vmem_limit_bytes=_VMEM_LIMIT),
    )(xr)


# ----------------------------------------------------------------------------- #
# Pallas kernel 5: adaptive average pooling to (1, 1), grid over batch
# ----------------------------------------------------------------------------- #
def _gap_kernel(x_ref, o_ref):
    o_ref[0] = (jnp.sum(x_ref[0].astype(jnp.float32), axis=0, keepdims=True)
                * (1.0 / x_ref.shape[1]))


@jax.jit
def global_avg_pool(x):
    """x NHWC -> [B, C, 1, 1] f32 (matches nn.AdaptiveAvgPool2d((1, 1)))."""
    B, H, W, C = x.shape
    y = pl.pallas_call(
        _gap_kernel,
        out_shape=jax.ShapeDtypeStruct((B, 1, C), jnp.float32),
        grid_spec=pltpu.PrefetchScalarGridSpec(
            num_scalar_prefetch=0,
            grid=(B,),
            in_specs=[pl.BlockSpec((1, H * W, C), lambda b: (b, 0, 0))],
            out_specs=pl.BlockSpec((1, 1, C), lambda b: (b, 0, 0)),
        ),
        compiler_params=pltpu.CompilerParams(
            dimension_semantics=("parallel",),
            vmem_limit_bytes=_VMEM_LIMIT),
    )(x.reshape(B, H * W, C))
    return y.reshape(B, C, 1, 1)


# ----------------------------------------------------------------------------- #
# Pallas kernel 6: bilinear resize to 299x299 + per-channel normalization
# ----------------------------------------------------------------------------- #
def _resize_norm_kernel(x_ref, ry_ref, rxt_ref, s_ref, b_ref, o_ref):
    c = pl.program_id(1)
    x = x_ref[0, 0]                                                   # [H, W]
    t = jnp.dot(ry_ref[...], x, preferred_element_type=jnp.float32)   # [299, W]
    y = jnp.dot(t, rxt_ref[...], preferred_element_type=jnp.float32)  # [299, 299]
    o_ref[0, 0] = y * s_ref[c] + b_ref[c]


def _bilinear_matrix(out_size, in_size):
    """Interpolation matrix R [out, in] for bilinear, align_corners=False."""
    m = np.zeros((out_size, in_size), np.float32)
    if in_size == 1:
        m[:, 0] = 1.0
        return m
    scale = in_size / out_size
    for i in range(out_size):
        src = (i + 0.5) * scale - 0.5
        i0 = int(np.floor(src))
        frac = src - i0
        i0c = min(max(i0, 0), in_size - 1)
        i1c = min(max(i0 + 1, 0), in_size - 1)
        m[i, i0c] += 1.0 - frac
        m[i, i1c] += frac
    return m


def resize_and_normalize(x, normalize, out_size=299):
    """x NCHW [B,3,H,W] -> NCHW [B,3,299,299] f32, normalized like the torch module."""
    B, C, H, W = x.shape
    ry = jnp.asarray(_bilinear_matrix(out_size, H))       # [299, H]
    rxt = jnp.asarray(_bilinear_matrix(out_size, W).T)    # [W, 299]
    if normalize:
        s = jnp.array([0.229 / 0.5, 0.224 / 0.5, 0.225 / 0.5], jnp.float32)
        b = jnp.array([(0.485 - 0.5) / 0.5, (0.456 - 0.5) / 0.5,
                       (0.406 - 0.5) / 0.5], jnp.float32)
    else:
        s = jnp.ones((C,), jnp.float32)
        b = jnp.zeros((C,), jnp.float32)

    return pl.pallas_call(
        _resize_norm_kernel,
        out_shape=jax.ShapeDtypeStruct((B, C, out_size, out_size), jnp.float32),
        grid_spec=pltpu.PrefetchScalarGridSpec(
            num_scalar_prefetch=0,
            grid=(B, C),
            in_specs=[
                pl.BlockSpec((1, 1, H, W), lambda bi, ci: (bi, ci, 0, 0)),
                pl.BlockSpec((out_size, H), lambda bi, ci: (0, 0)),
                pl.BlockSpec((W, out_size), lambda bi, ci: (0, 0)),
                pl.BlockSpec(memory_space=pltpu.MemorySpace.SMEM),
                pl.BlockSpec(memory_space=pltpu.MemorySpace.SMEM),
            ],
            out_specs=pl.BlockSpec((1, 1, out_size, out_size),
                                   lambda bi, ci: (bi, ci, 0, 0)),
        ),
        compiler_params=pltpu.CompilerParams(
            dimension_semantics=("parallel", "parallel"),
            vmem_limit_bytes=_VMEM_LIMIT),
    )(x, ry, rxt, s, b)


# ----------------------------------------------------------------------------- #
# JAX glue: strided-conv im2col (few layers) + conv/BN/ReLU layer builders
# ----------------------------------------------------------------------------- #
def extract_patches(x, kh, kw, sh, sw, ph, pw):
    """x NHWC -> patches [B, Ho, Wo, kh*kw*C] ordered (ki, kj, c).  Strided convs only."""
    B, H, W, C = x.shape
    if ph or pw:
        x = jnp.pad(x, ((0, 0), (ph, ph), (pw, pw), (0, 0)))
    Hp, Wp = H + 2 * ph, W + 2 * pw
    Ho = (Hp - kh) // sh + 1
    Wo = (Wp - kw) // sw + 1
    cols = []
    for i in range(kh):
        for j in range(kw):
            cols.append(x[:, i:i + sh * (Ho - 1) + 1:sh,
                          j:j + sw * (Wo - 1) + 1:sw, :])
    return jnp.concatenate(cols, axis=-1), Ho, Wo


def basic_conv(x, p, stride=(1, 1), padding=(0, 0)):
    """BasicConv2d = Conv(no bias) + BatchNorm(eps=1e-3, eval) + ReLU, NHWC bf16."""
    kh, kw, Cin, Cout = p["w"].shape
    x = x.astype(jnp.bfloat16)
    if (kh, kw) == (1, 1) and stride == (1, 1):
        B, H, W, _ = x.shape
        y = matmul_scale_bias_act(x.reshape(B * H * W, Cin),
                                  p["w"].reshape(Cin, Cout),
                                  p["scale"], p["bias"], relu=True)
        return y.reshape(B, H, W, Cout)
    if stride == (1, 1):
        return conv2d_fused(x, p["w"], p["scale"], p["bias"], padding=padding)
    # stride-2 convs (c1a, Mixed_6a, Mixed_7a): small patch volume, im2col + matmul
    pats, Ho, Wo = extract_patches(x, kh, kw, stride[0], stride[1],
                                   padding[0], padding[1])
    B = x.shape[0]
    Kd = pats.shape[-1]
    y = matmul_scale_bias_act(pats.reshape(B * Ho * Wo, Kd),
                              p["w"].reshape(Kd, Cout),
                              p["scale"], p["bias"], relu=True)
    return y.reshape(B, Ho, Wo, Cout)


def fused_conv1x1(x, plist):
    """Several 1x1/stride-1 BasicConv2d that share the same input x, run as one
    wide-N matmul (shared x DMA, one kernel launch); outputs split along C."""
    B, H, W, Cin = x.shape
    w = jnp.concatenate([p["w"].reshape(Cin, -1) for p in plist], axis=-1)
    s = jnp.concatenate([p["scale"] for p in plist])
    b = jnp.concatenate([p["bias"] for p in plist])
    y = matmul_scale_bias_act(x.astype(jnp.bfloat16).reshape(B * H * W, Cin),
                              w, s, b, relu=True)
    y = y.reshape(B, H, W, -1)
    outs, off = [], 0
    for p in plist:
        c = p["w"].shape[-1]
        outs.append(y[..., off:off + c])
        off += c
    return outs


# ---- deterministic synthetic parameters -------------------------------------- #
def make_conv(rng, cin, cout, kh, kw):
    w = rng.normal(0.0, np.sqrt(2.0 / (cin * kh * kw)),
                   size=(kh, kw, cin, cout)).astype(np.float32)
    gamma = (1.0 + 0.1 * rng.normal(size=cout)).astype(np.float32)
    beta = (0.05 * rng.normal(size=cout)).astype(np.float32)
    rmean = (0.05 * rng.normal(size=cout)).astype(np.float32)
    rvar = rng.uniform(0.8, 1.2, size=cout).astype(np.float32)
    scale = gamma / np.sqrt(rvar + 1e-3)          # BatchNorm2d eps=0.001
    bias = beta - rmean * scale
    return dict(w=jnp.asarray(w, dtype=jnp.bfloat16),   # MXU operand dtype
                scale=jnp.asarray(scale), bias=jnp.asarray(bias))


def make_inception_a(rng, cin, pool_features):
    return dict(b1=make_conv(rng, cin, 64, 1, 1),
                b5_1=make_conv(rng, cin, 48, 1, 1),
                b5_2=make_conv(rng, 48, 64, 5, 5),
                b3_1=make_conv(rng, cin, 64, 1, 1),
                b3_2=make_conv(rng, 64, 96, 3, 3),
                b3_3=make_conv(rng, 96, 96, 3, 3),
                bp=make_conv(rng, cin, pool_features, 1, 1))


def make_inception_b(rng, cin):
    return dict(b3=make_conv(rng, cin, 384, 3, 3),
                bd_1=make_conv(rng, cin, 64, 1, 1),
                bd_2=make_conv(rng, 64, 96, 3, 3),
                bd_3=make_conv(rng, 96, 96, 3, 3))


def make_inception_c(rng, cin, c7):
    return dict(b1=make_conv(rng, cin, 192, 1, 1),
                b7_1=make_conv(rng, cin, c7, 1, 1),
                b7_2=make_conv(rng, c7, c7, 1, 7),
                b7_3=make_conv(rng, c7, 192, 7, 1),
                bd_1=make_conv(rng, cin, c7, 1, 1),
                bd_2=make_conv(rng, c7, c7, 7, 1),
                bd_3=make_conv(rng, c7, c7, 1, 7),
                bd_4=make_conv(rng, c7, c7, 7, 1),
                bd_5=make_conv(rng, c7, 192, 1, 7),
                bp=make_conv(rng, cin, 192, 1, 1))


def make_inception_d(rng, cin):
    return dict(b3_1=make_conv(rng, cin, 192, 1, 1),
                b3_2=make_conv(rng, 192, 320, 3, 3),
                b7_1=make_conv(rng, cin, 192, 1, 1),
                b7_2=make_conv(rng, 192, 192, 1, 7),
                b7_3=make_conv(rng, 192, 192, 7, 1),
                b7_4=make_conv(rng, 192, 192, 3, 3))


def make_inception_e(rng, cin):
    return dict(b1=make_conv(rng, cin, 320, 1, 1),
                b3_1=make_conv(rng, cin, 384, 1, 1),
                b3_2a=make_conv(rng, 384, 384, 1, 3),
                b3_2b=make_conv(rng, 384, 384, 3, 1),
                bd_1=make_conv(rng, cin, 448, 1, 1),
                bd_2=make_conv(rng, 448, 384, 3, 3),
                bd_3a=make_conv(rng, 384, 384, 1, 3),
                bd_3b=make_conv(rng, 384, 384, 3, 1),
                bp=make_conv(rng, cin, 192, 1, 1))


def make_params(seed=1234):
    rng = np.random.default_rng(seed)
    return dict(
        c1a=make_conv(rng, 3, 32, 3, 3),
        c2a=make_conv(rng, 32, 32, 3, 3),
        c2b=make_conv(rng, 32, 64, 3, 3),
        c3b=make_conv(rng, 64, 80, 1, 1),
        c4a=make_conv(rng, 80, 192, 3, 3),
        m5b=make_inception_a(rng, 192, 32),
        m5c=make_inception_a(rng, 256, 64),
        m5d=make_inception_a(rng, 288, 64),
        m6a=make_inception_b(rng, 288),
        m6b=make_inception_c(rng, 768, 128),
        m6c=make_inception_c(rng, 768, 160),
        m6d=make_inception_c(rng, 768, 160),
        m6e=make_inception_c(rng, 768, 192),
        m7a=make_inception_d(rng, 768),
        m7b=make_inception_e(rng, 1280),
        m7c=make_inception_e(rng, 2048),
    )


# ---- Inception mixed blocks (forward) ----------------------------------------- #
def inception_a(x, p):
    b1, b5, b3 = fused_conv1x1(x, (p["b1"], p["b5_1"], p["b3_1"]))
    b5 = basic_conv(b5, p["b5_2"], padding=(2, 2))
    b3 = basic_conv(b3, p["b3_2"], padding=(1, 1))
    b3 = basic_conv(b3, p["b3_3"], padding=(1, 1))
    bp = avg_pool_3x3_s1_p1(x)
    bp = basic_conv(bp, p["bp"])
    return jnp.concatenate([b1, b5, b3, bp], axis=-1)


def inception_b(x, p):
    b3 = basic_conv(x, p["b3"], stride=(2, 2))
    bd = basic_conv(x, p["bd_1"])
    bd = basic_conv(bd, p["bd_2"], padding=(1, 1))
    bd = basic_conv(bd, p["bd_3"], stride=(2, 2))
    bp = max_pool_3x3_s2(x)
    return jnp.concatenate([b3, bd, bp], axis=-1)


def inception_c(x, p):
    b1, b7, bd = fused_conv1x1(x, (p["b1"], p["b7_1"], p["bd_1"]))
    b7 = basic_conv(b7, p["b7_2"], padding=(0, 3))
    b7 = basic_conv(b7, p["b7_3"], padding=(3, 0))
    bd = basic_conv(bd, p["bd_2"], padding=(3, 0))
    bd = basic_conv(bd, p["bd_3"], padding=(0, 3))
    bd = basic_conv(bd, p["bd_4"], padding=(3, 0))
    bd = basic_conv(bd, p["bd_5"], padding=(0, 3))
    bp = avg_pool_3x3_s1_p1(x)
    bp = basic_conv(bp, p["bp"])
    return jnp.concatenate([b1, b7, bd, bp], axis=-1)


def inception_d(x, p):
    b3, b7 = fused_conv1x1(x, (p["b3_1"], p["b7_1"]))
    b3 = basic_conv(b3, p["b3_2"], stride=(2, 2))
    b7 = basic_conv(b7, p["b7_2"], padding=(0, 3))
    b7 = basic_conv(b7, p["b7_3"], padding=(3, 0))
    b7 = basic_conv(b7, p["b7_4"], stride=(2, 2))
    bp = max_pool_3x3_s2(x)
    return jnp.concatenate([b3, b7, bp], axis=-1)


def inception_e(x, p):
    b1, b3, bd = fused_conv1x1(x, (p["b1"], p["b3_1"], p["bd_1"]))
    b3 = jnp.concatenate([basic_conv(b3, p["b3_2a"], padding=(0, 1)),
                          basic_conv(b3, p["b3_2b"], padding=(1, 0))], axis=-1)
    bd = basic_conv(bd, p["bd_2"], padding=(1, 1))
    bd = jnp.concatenate([basic_conv(bd, p["bd_3a"], padding=(0, 1)),
                          basic_conv(bd, p["bd_3b"], padding=(1, 0))], axis=-1)
    bp = avg_pool_3x3_s1_p1(x)
    bp = basic_conv(bp, p["bp"])
    return jnp.concatenate([b1, b3, bd, bp], axis=-1)


def _to_nchw(x):
    return jnp.transpose(x, (0, 3, 1, 2)).astype(jnp.float32)


# ---- full forward, mirroring InceptionV3.forward ------------------------------ #
def inception_v3_forward(inp, params, output_blocks=(3,),
                         resize_input=True, normalize_input=True):
    output_blocks = sorted(output_blocks)
    last = max(output_blocks)
    assert last <= 3, "Last possible output block index is 3"
    assert resize_input, "only resize_input=True is supported by this kernel port"

    outp = []
    x = resize_and_normalize(inp, normalize_input)        # NCHW [B,3,299,299] f32
    x = jnp.transpose(x, (0, 2, 3, 1)).astype(jnp.bfloat16)   # -> NHWC bf16

    # block 0
    x = basic_conv(x, params["c1a"], stride=(2, 2))
    x = basic_conv(x, params["c2a"])
    x = basic_conv(x, params["c2b"], padding=(1, 1))
    x = max_pool_3x3_s2(x)
    if 0 in output_blocks:
        outp.append(_to_nchw(x))
    if last == 0:
        return outp

    # block 1
    x = basic_conv(x, params["c3b"])
    x = basic_conv(x, params["c4a"])
    x = max_pool_3x3_s2(x)
    if 1 in output_blocks:
        outp.append(_to_nchw(x))
    if last == 1:
        return outp

    # block 2
    x = inception_a(x, params["m5b"])
    x = inception_a(x, params["m5c"])
    x = inception_a(x, params["m5d"])
    x = inception_b(x, params["m6a"])
    x = inception_c(x, params["m6b"])
    x = inception_c(x, params["m6c"])
    x = inception_c(x, params["m6d"])
    x = inception_c(x, params["m6e"])
    if 2 in output_blocks:
        outp.append(_to_nchw(x))
    if last == 2:
        return outp

    # block 3
    x = inception_d(x, params["m7a"])
    x = inception_e(x, params["m7b"])
    x = inception_e(x, params["m7c"])
    x = global_avg_pool(x)                                # [B, 2048, 1, 1] f32
    if 3 in output_blocks:
        outp.append(x)
    return outp


# ----------------------------------------------------------------------------- #
if __name__ == "__main__":
    params = make_params()
    key = jax.random.PRNGKey(0)
    # Input tensor of shape Bx3xHxW, values in (0, 1), as the module expects.
    x = jax.random.uniform(key, (2, 3, 16, 16), dtype=jnp.float32)

    feats = inception_v3_forward(x, params, output_blocks=(3,))
    feats = [jax.block_until_ready(f) for f in feats]

    assert len(feats) == 1
    assert feats[0].shape == (2, 2048, 1, 1), feats[0].shape
    assert feats[0].dtype == jnp.float32
    print("KERNEL_OK")
</pallas_src>

<mosaic_0001>
module attributes {stable_mosaic.version = 11 : i64} {
  func.func @_resize_norm_kernel(%arg0: i32, %arg1: i32, %arg2: memref<1x1x16x16xf32, #tpu.memory_space<vmem>>, %arg3: memref<299x16xf32, #tpu.memory_space<vmem>>, %arg4: memref<16x299xf32, #tpu.memory_space<vmem>>, %arg5: memref<3xf32, #tpu.memory_space<smem>>, %arg6: memref<3xf32, #tpu.memory_space<smem>>, %arg7: memref<1x1x299x299xf32, #tpu.memory_space<vmem>>) attributes {dimension_semantics = [#tpu.dimension_semantics<parallel>, #tpu.dimension_semantics<parallel>], iteration_bounds = array<i64: 2, 3>, scalar_prefetch = 0 : i64, scratch_operands = 0 : i64, tpu.core_type = #tpu.core_type<tc>, window_params = [{transform_indices = @transform_0, window_bounds = array<i64: 1, 1, 16, 16>}, {pipeline_mode = #tpu.pipeline_mode<synchronous>, transform_indices = @transform_1, window_bounds = array<i64: 299, 16>}, {pipeline_mode = #tpu.pipeline_mode<synchronous>, transform_indices = @transform_2, window_bounds = array<i64: 16, 299>}, {transform_indices = @transform_3, window_bounds = array<i64: 3>}, {transform_indices = @transform_4, window_bounds = array<i64: 3>}, {transform_indices = @transform_5, window_bounds = array<i64: 1, 1, 299, 299>}]} {
    %c0 = arith.constant 0 : index
    %c0_0 = arith.constant 0 : index
    %c0_1 = arith.constant 0 : index
    %c0_2 = arith.constant 0 : index
    %0 = vector.load %arg2[%c0, %c0_0, %c0_1, %c0_2] : memref<1x1x16x16xf32, #tpu.memory_space<vmem>>, vector<1x1x16x16xf32>
    %1 = vector.shape_cast %0 : vector<1x1x16x16xf32> to vector<16x16xf32>
    %c0_3 = arith.constant 0 : index
    %c0_4 = arith.constant 0 : index
    %2 = vector.load %arg3[%c0_3, %c0_4] : memref<299x16xf32, #tpu.memory_space<vmem>>, vector<299x16xf32>
    %cst = arith.constant dense<0.000000e+00> : vector<299x16xf32>
    %3 = tpu.matmul %2, %1, %cst {dimension_numbers = #tpu.dot_dimension_numbers<[1], [0], [0], [1], [0, 0, 1, 1], [], []>} : vector<299x16xf32>, vector<16x16xf32>, vector<299x16xf32> -> vector<299x16xf32>
    %c0_5 = arith.constant 0 : index
    %c0_6 = arith.constant 0 : index
    %4 = vector.load %arg4[%c0_5, %c0_6] : memref<16x299xf32, #tpu.memory_space<vmem>>, vector<16x299xf32>
    %cst_7 = arith.constant dense<0.000000e+00> : vector<299x299xf32>
    %5 = tpu.matmul %3, %4, %cst_7 {dimension_numbers = #tpu.dot_dimension_numbers<[1], [0], [0], [1], [0, 0, 1, 1], [], []>} : vector<299x16xf32>, vector<16x299xf32>, vector<299x299xf32> -> vector<299x299xf32>
    %6 = arith.index_cast %arg1 : i32 to index
    %7 = memref.load %arg5[%6] : memref<3xf32, #tpu.memory_space<smem>>
    %8 = vector.broadcast %7 : f32 to vector<299x299xf32>
    %9 = arith.mulf %5, %8 : vector<299x299xf32>
    %10 = arith.index_cast %arg1 : i32 to index
    %11 = memref.load %arg6[%10] : memref<3xf32, #tpu.memory_space<smem>>
    %12 = vector.broadcast %11 : f32 to vector<299x299xf32>
    %13 = arith.addf %9, %12 : vector<299x299xf32>
    %c0_8 = arith.constant 0 : index
    %c0_9 = arith.constant 0 : index
    %c0_10 = arith.constant 0 : index
    %c0_11 = arith.constant 0 : index
    %14 = vector.load %arg7[%c0_8, %c0_9, %c0_10, %c0_11] : memref<1x1x299x299xf32, #tpu.memory_space<vmem>>, vector<1x1x299x299xf32>
    %15 = vector.shape_cast %14 : vector<1x1x299x299xf32> to vector<299x299xf32>
    %16 = vector.shape_cast %13 : vector<299x299xf32> to vector<1x1x299x299xf32>
    tpu.vector_store %arg7[%c0_8, %c0_9, %c0_10, %c0_11], %16 {strides = array<i32>} : memref<1x1x299x299xf32, #tpu.memory_space<vmem>>, vector<1x1x299x299xf32>,
    return
  }
  func.func @transform_0(%arg0: i32, %arg1: i32) -> (i32, i32, i32, i32) {
    %c0_i32 = arith.constant 0 : i32
    %c0_i32_0 = arith.constant 0 : i32
    %c0_i32_1 = arith.constant 0 : i32
    return %arg0, %arg1, %c0_i32, %c0_i32_0 : i32, i32, i32, i32
  }
  func.func @transform_1(%arg0: i32, %arg1: i32) -> (i32, i32) {
    %c0_i32 = arith.constant 0 : i32
    %c0_i32_0 = arith.constant 0 : i32
    %c0_i32_1 = arith.constant 0 : i32
    return %c0_i32, %c0_i32_0 : i32, i32
  }
  func.func @transform_2(%arg0: i32, %arg1: i32) -> (i32, i32) {
    %c0_i32 = arith.constant 0 : i32
    %c0_i32_0 = arith.constant 0 : i32
    %c0_i32_1 = arith.constant 0 : i32
    return %c0_i32, %c0_i32_0 : i32, i32
  }
  func.func @transform_3(%arg0: i32, %arg1: i32) -> i32 {
    %c0_i32 = arith.constant 0 : i32
    %c0_i32_0 = arith.constant 0 : i32
    return %c0_i32 : i32
  }
  func.func @transform_4(%arg0: i32, %arg1: i32) -> i32 {
    %c0_i32 = arith.constant 0 : i32
    %c0_i32_0 = arith.constant 0 : i32
    return %c0_i32 : i32
  }
  func.func @transform_5(%arg0: i32, %arg1: i32) -> (i32, i32, i32, i32) {
    %c0_i32 = arith.constant 0 : i32
    %c0_i32_0 = arith.constant 0 : i32
    %c0_i32_1 = arith.constant 0 : i32
    return %arg0, %arg1, %c0_i32, %c0_i32_0 : i32, i32, i32, i32
  }
}

</mosaic_0001>

<llo_original>
// kernel: tpu_custom_call.1
$region0: #{tpu_custom_call.1}
  #allocation0 [shape = 'u32[]', space=smem, size = 0x4, offset = 0x4, fixed_abs, tag = 'smem constant byte address 0x4 - core index']
  #allocation1 [shape = 'u32[72,128]{1,0:T(1,128)}', space=vmem, size = 0x9000, scoped, tag = 'internal scratch']
  %s0 = inlined_call_operand.hbm [shape: f32[2,3,16,16], index: 0, kind: input, shape index: {}]
  %s1 = inlined_call_operand.vmem [shape: f32[299,16], index: 1, kind: input, shape index: {}]
  %s2 = inlined_call_operand.hbm [shape: f32[16,299], index: 2, kind: input, shape index: {}]
  %s3 = inlined_call_operand.hbm [shape: f32[3], index: 3, kind: input, shape index: {}]
  %s4 = inlined_call_operand.hbm [shape: f32[3], index: 4, kind: input, shape index: {}]
  %s5 = inlined_call_operand.vmem [shape: f32[2,3,299,299], index: 5, kind: output, shape index: {}]
  %s6 = sld [smem:[#allocation0]]
  $region69: #{tpu_custom_call.1} parent=0
    _
  %s8 = ssub.s32 1, %s6
  %s9 = scalar_select 0, %s8, %s6
  $region1: #{tpu_custom_call.1} parent=0
    #allocation2 [shape = 'u8[16384]{0}', space=vmem, size = 0x4000, scoped, tag = 'input window, operand 0']
    #allocation3 [shape = 's32[2]{0}', space=sflag, size = 0x8, scoped, tag = 'scoped memory for tpu_custom_call.1']
    #allocation4 [shape = 's32[2]{0}', space=sflag, size = 0x8, scoped, tag = 'scoped memory for tpu_custom_call.1']
    #allocation5 [shape = 'u8[24576]{0}', space=vmem, size = 0x6000, scoped, tag = 'input window, operand 2, single buffered']
    #allocation6 [shape = 's32[1]{0}', space=sflag, size = 0x4, scoped, tag = 'scoped memory for tpu_custom_call.1']
    #allocation7 [shape = 'u8[512]{0}', space=smem, size = 0x200, scoped, tag = 'input window, operand 3, single buffered']
    #allocation8 [shape = 'u8[512]{0}', space=smem, size = 0x200, scoped, tag = 'input window, operand 4, single buffered']
    #allocation9 [shape = 's32[1]{0}', space=sflag, size = 0x4, scoped, tag = 'scoped memory for tpu_custom_call.1']
    %10 = vsyncpa [#allocation3], 0
    %s11 = scalar_lea.sflag [#allocation3], 1
    %12 = vsyncpa %s11, 0
    %13 = vsyncpa [#allocation6], 0
    %14 = vsyncpa [#allocation4], 0
    %15 = vsyncpa [#allocation9], 0
    loop: start=0, step=1, limit=8
    $region2: #{tpu_custom_call.1} parent=1 // loop_pre_header
      _
    $region3: #{tpu_custom_call.1} parent=1 // loop_header
      %s17 = sphi 0, %s21
      %p18 = scmp.ge.s32.totalorder %s17, 8
      %s24 = sphi 0, %s36
      %s25 = sphi 0, %s32
      %s26 = sphi 0, %s24
      %s27 = sphi 0, %s25
      %s28 = sphi 0, %s26
      %s29 = sphi 0, %s27
      %s41 = sphi 0, %s43
      %s44 = sphi 0, %s41
      %s45 = sphi 0, %s44
      %s61 = sphi 0, %s45
      %s65 = sphi 0, %s65
      %s67 = sphi 0, %s65
      %s68 = sphi 0, %s67
      %s82 = sphi 0, %s68
      %s86 = sphi 0, %s86
      %s88 = sphi 0, %s86
      %s89 = sphi 0, %s88
      %s103 = sphi 0, %s89
      %s107 = sphi 0, %s107
      %s109 = sphi 0, %s107
      %s110 = sphi 0, %s109
      %s124 = sphi 0, %s110
      %s128 = sphi 0, %s128
      %s130 = sphi 0, %s128
      %s131 = sphi 0, %s130
      %s145 = sphi 0, %s131
      %s153 = sphi 0, %s155
      %s156 = sphi 0, %s153
      %s157 = sphi 0, %s156
      %s173 = sphi 0, %s157
    $region4: #{tpu_custom_call.1} parent=1 // loop_header_branch
      %20 = sbr.rel (%p18) target = $region8
    $region5: #{tpu_custom_call.1} parent=1 // loop_body
      %s22 = ssub.s32 %s17, 1
      %s23 = ssub.s32 %s17, 2
      %s30 = sadd.s32 1, %s25
      %p31 = scmp.ge.s32.totalorder %s30, 3
      %s32 = scalar_select %p31, 0, %s30
      %s33 = sadd.s32 1, %s24
      %s34 = scalar_select %p31, %s33, %s24
      %p35 = scmp.ge.s32.totalorder %s34, 2
      %s36 = scalar_select %p35, 0, %s34
      %s37 = ssub.s32 %s24, %s36
      %s38 = ssub.s32 %s25, %s32
      %s39 = sor.u32 %s37, %s38
      %p40 = scmp.eq.s32.totalorder %s39, 0
      %s42 = sadd.s32 %s41, 1
      %s43 = scalar_select %p40, %s41, %s42
      %p46 = pneg %p40
      %p47 = scmp.eq.s32.totalorder %s17, 5
      %p48 = por %p46, %p47
      %p49 = scmp.ne.s32.totalorder %s41, %s44
      %p50 = scmp.eq.s32.totalorder %s17, 0
      %p51 = por %p49, %p50
      %p52 = scmp.ne.s32.totalorder %s41, %s44
      %p53 = scmp.eq.s32.totalorder %s22, 5
      %p54 = por %p52, %p53
      %p55 = scmp.ne.s32.totalorder %s44, %s45
      %p56 = scmp.eq.s32.totalorder %s22, 0
      %p57 = por %p55, %p56
      %p58 = scmp.ne.s32.totalorder %s44, %s45
      %p59 = scmp.eq.s32.totalorder %s23, 5
      %p60 = por %p58, %p59
      %p62 = scmp.ne.s32.totalorder %s45, %s61
      %p63 = scmp.eq.s32.totalorder %s23, 0
      %p64 = por %p62, %p63
      %s66 = sadd.s32 %s65, 1
      %p69 = scmp.eq.s32.totalorder %s17, 5
      %p70 = scmp.ne.s32.totalorder %s65, %s67
      %p71 = scmp.eq.s32.totalorder %s17, 0
      %p72 = por %p70, %p71
      %p73 = scmp.ne.s32.totalorder %s65, %s67
      %p74 = scmp.eq.s32.totalorder %s22, 5
      %p75 = por %p73, %p74
      %p76 = scmp.ne.s32.totalorder %s67, %s68
      %p77 = scmp.eq.s32.totalorder %s22, 0
      %p78 = por %p76, %p77
      %p79 = scmp.ne.s32.totalorder %s67, %s68
      %p80 = scmp.eq.s32.totalorder %s23, 5
      %p81 = por %p79, %p80
      %p83 = scmp.ne.s32.totalorder %s68, %s82
      %p84 = scmp.eq.s32.totalorder %s23, 0
      %p85 = por %p83, %p84
      %s87 = sadd.s32 %s86, 1
      %p90 = scmp.eq.s32.totalorder %s17, 5
      %p91 = scmp.ne.s32.totalorder %s86, %s88
      %p92 = scmp.eq.s32.totalorder %s17, 0
      %p93 = por %p91, %p92
      %p94 = scmp.ne.s32.totalorder %s86, %s88
      %p95 = scmp.eq.s32.totalorder %s22, 5
      %p96 = por %p94, %p95
      %p97 = scmp.ne.s32.totalorder %s88, %s89
      %p98 = scmp.eq.s32.totalorder %s22, 0
      %p99 = por %p97, %p98
      %p100 = scmp.ne.s32.totalorder %s88, %s89
      %p101 = scmp.eq.s32.totalorder %s23, 5
      %p102 = por %p100, %p101
      %p104 = scmp.ne.s32.totalorder %s89, %s103
      %p105 = scmp.eq.s32.totalorder %s23, 0
      %p106 = por %p104, %p105
      %s108 = sadd.s32 %s107, 1
      %p111 = scmp.eq.s32.totalorder %s17, 5
      %p112 = scmp.ne.s32.totalorder %s107, %s109
      %p113 = scmp.eq.s32.totalorder %s17, 0
      %p114 = por %p112, %p113
      %p115 = scmp.ne.s32.totalorder %s107, %s109
      %p116 = scmp.eq.s32.totalorder %s22, 5
      %p117 = por %p115, %p116
      %p118 = scmp.ne.s32.totalorder %s109, %s110
      %p119 = scmp.eq.s32.totalorder %s22, 0
      %p120 = por %p118, %p119
      %p121 = scmp.ne.s32.totalorder %s109, %s110
      %p122 = scmp.eq.s32.totalorder %s23, 5
      %p123 = por %p121, %p122
      %p125 = scmp.ne.s32.totalorder %s110, %s124
      %p126 = scmp.eq.s32.totalorder %s23, 0
      %p127 = por %p125, %p126
      %s129 = sadd.s32 %s128, 1
      %p132 = scmp.eq.s32.totalorder %s17, 5
      %p133 = scmp.ne.s32.totalorder %s128, %s130
      %p134 = scmp.eq.s32.totalorder %s17, 0
      %p135 = por %p133, %p134
      %p136 = scmp.ne.s32.totalorder %s128, %s130
      %p137 = scmp.eq.s32.totalorder %s22, 5
      %p138 = por %p136, %p137
      %p139 = scmp.ne.s32.totalorder %s130, %s131
      %p140 = scmp.eq.s32.totalorder %s22, 0
      %p141 = por %p139, %p140
      %p142 = scmp.ne.s32.totalorder %s130, %s131
      %p143 = scmp.eq.s32.totalorder %s23, 5
      %p144 = por %p142, %p143
      %p146 = scmp.ne.s32.totalorder %s131, %s145
      %p147 = scmp.eq.s32.totalorder %s23, 0
      %p148 = por %p146, %p147
      %s149 = ssub.s32 %s24, %s36
      %s150 = ssub.s32 %s25, %s32
      %s151 = sor.u32 %s149, %s150
      %p152 = scmp.eq.s32.totalorder %s151, 0
      %s154 = sadd.s32 %s153, 1
      %s155 = scalar_select %p152, %s153, %s154
      %p158 = pneg %p152
      %p159 = scmp.eq.s32.totalorder %s17, 5
      %p160 = por %p158, %p159
      %p161 = scmp.ne.s32.totalorder %s153, %s156
      %p162 = scmp.eq.s32.totalorder %s17, 0
      %p163 = por %p161, %p162
      %p164 = scmp.ne.s32.totalorder %s153, %s156
      %p165 = scmp.eq.s32.totalorder %s22, 5
      %p166 = por %p164, %p165
      %p167 = scmp.ne.s32.totalorder %s156, %s157
      %p168 = scmp.eq.s32.totalorder %s22, 0
      %p169 = por %p167, %p168
      %p170 = scmp.ne.s32.totalorder %s156, %s157
      %p171 = scmp.eq.s32.totalorder %s23, 5
      %p172 = por %p170, %p171
      %p174 = scmp.ne.s32.totalorder %s157, %s173
      %p175 = scmp.eq.s32.totalorder %s23, 0
      %p176 = por %p174, %p175
      %p177 = scmp.le.s32.totalorder 1, %s17
      %p178 = scmp.lt.s32.totalorder %s17, 7
      %p179 = pnand %p177, %p178
      %p180 = pneg %p179
      // Predicated region
      $region9: #{tpu_custom_call.1} parent=5 // pred_check
        _
      $region10: #{tpu_custom_call.1} parent=5 // pred_check_branch
        %182 = sbr.rel (%p179) target = $region12
      $region11: #{tpu_custom_call.1} parent=5 // pred_region
        %s183 = ssub.s32 %s17, 1
        // Predicated region
        $region13: #{tpu_custom_call.1} parent=11 // pred_check
          %p184 = pneg %p78
        $region14: #{tpu_custom_call.1} parent=11 // pred_check_branch
          %186 = sbr.rel (%p184) target = $region16
        $region15: #{tpu_custom_call.1} parent=11 // pred_region
          _
        $region16: #{tpu_custom_call.1} parent=11 // pred_fallthru
          _
        // Predicated region
        $region17: #{tpu_custom_call.1} parent=11 // pred_check
          %p187 = pneg %p99
        $region18: #{tpu_custom_call.1} parent=11 // pred_check_branch
          %189 = sbr.rel (%p187) target = $region20
        $region19: #{tpu_custom_call.1} parent=11 // pred_region
          %191 = vsyncadd [#allocation6], 0
          %s192 = sshll.u32 %s2, 4
          %s193 = int_to_ptr.hbm [resolvable:$true] %s192
          %s194 = sshll.u32 [#allocation5], 4
          %s195 = int_to_ptr.vmem [resolvable:$true] %s194
          %200 = dma.hbm_to_vmem [thread:$0]  %s193, 768, %s195, [#allocation6], 384, 384, 24
        $region20: #{tpu_custom_call.1} parent=11 // pred_fallthru
          _
        // Predicated region
        $region21: #{tpu_custom_call.1} parent=11 // pred_check
          %p201 = pneg %p120
        $region22: #{tpu_custom_call.1} parent=11 // pred_check_branch
          %203 = sbr.rel (%p201) target = $region24
        $region23: #{tpu_custom_call.1} parent=11 // pred_region
          %205 = vsyncadd [#allocation4], 0
          %s207 = sshll.u32 %s3, 4
          %s208 = int_to_ptr.hbm [resolvable:$true] %s207
          %210 = dma.hbm_to_smem %s208, 16, [#allocation7], [#allocation4]
        $region24: #{tpu_custom_call.1} parent=11 // pred_fallthru
          _
        // Predicated region
        $region25: #{tpu_custom_call.1} parent=11 // pred_check
          %p211 = pneg %p141
        $region26: #{tpu_custom_call.1} parent=11 // pred_check_branch
          %213 = sbr.rel (%p211) target = $region28
        $region27: #{tpu_custom_call.1} parent=11 // pred_region
          %215 = vsyncadd [#allocation9], 0
          %s217 = sshll.u32 %s4, 4
          %s218 = int_to_ptr.hbm [resolvable:$true] %s217
          %220 = dma.hbm_to_smem %s218, 16, [#allocation8], [#allocation9]
        $region28: #{tpu_custom_call.1} parent=11 // pred_fallthru
          _
      $region12: #{tpu_custom_call.1} parent=5 // pred_fallthru
        _
      %p221 = scmp.lt.s32.totalorder %s17, 6
      // Predicated region
      $region29: #{tpu_custom_call.1} parent=5 // pred_check
        %p222 = pneg %p221
      $region30: #{tpu_custom_call.1} parent=5 // pred_check_branch
        %224 = sbr.rel (%p222) target = $region32
      $region31: #{tpu_custom_call.1} parent=5 // pred_region
        // Predicated region
        $region33: #{tpu_custom_call.1} parent=31 // pred_check
          %p225 = pneg %p51
        $region34: #{tpu_custom_call.1} parent=31 // pred_check_branch
          %227 = sbr.rel (%p225) target = $region36
        $region35: #{tpu_custom_call.1} parent=31 // pred_region
          %s228 = sand.u32 %s41, 1
          %s229 = scalar_lea.sflag [#allocation3], %s228
          %s230 = sand.u32 %s41, 1
          %s231 = smul.addr %s230, 16
          %s232 = scalar_lea.vmem [#allocation2], %s231
          %234 = vsyncadd %s229, 0
          %s235 = smul.addr %s25, 2
          %s236 = smul.addr %s24, 6
          %s237 = sadd.s32 %s235, %s236
          %s238 = smul.addr %s237, 8
          %s239 = scalar_lea.hbm %s0, %s238
          %s240 = sshll.u32 %s239, 4
          %s241 = int_to_ptr.hbm [resolvable:$true] %s240
          %s242 = sshll.u32 %s232, 4
          %s243 = int_to_ptr.vmem [resolvable:$true] %s242
          %248 = dma.hbm_to_vmem [thread:$0]  %s241, 256, %s243, %s229, 128, 128, 8
        $region36: #{tpu_custom_call.1} parent=31 // pred_fallthru
          _
      $region32: #{tpu_custom_call.1} parent=5 // pred_fallthru
        _
      %p249 = scmp.le.s32.totalorder 1, %s17
      %p250 = scmp.lt.s32.totalorder %s17, 7
      %p251 = pnand %p249, %p250
      %p252 = pneg %p251
      // Predicated region
      $region37: #{tpu_custom_call.1} parent=5 // pred_check
        _
      $region38: #{tpu_custom_call.1} parent=5 // pred_check_branch
        %254 = sbr.rel (%p251) target = $region40
      $region39: #{tpu_custom_call.1} parent=5 // pred_region
        %s255 = ssub.s32 %s17, 1
        %s256 = sand.u32 %s44, 1
        %s257 = scalar_lea.sflag [#allocation3], %s256
        %s258 = sand.u32 %s44, 1
        %s259 = smul.addr %s258, 16
        %s260 = scalar_lea.vmem [#allocation2], %s259
        // Predicated region
        $region41: #{tpu_custom_call.1} parent=39 // pred_check
          %p261 = pneg %p57
        $region42: #{tpu_custom_call.1} parent=39 // pred_check_branch
          %263 = sbr.rel (%p261) target = $region44
        $region43: #{tpu_custom_call.1} parent=39 // pred_region
          %265 = dma.done %s257, 256
        $region44: #{tpu_custom_call.1} parent=39 // pred_fallthru
          _
        // Predicated region
        $region45: #{tpu_custom_call.1} parent=39 // pred_check
          %p266 = pneg %p99
        $region46: #{tpu_custom_call.1} parent=39 // pred_check_branch
          %268 = sbr.rel (%p266) target = $region48
        $region47: #{tpu_custom_call.1} parent=39 // pred_region
          %270 = dma.done [#allocation6], 768
        $region48: #{tpu_custom_call.1} parent=39 // pred_fallthru
          _
        // Predicated region
        $region49: #{tpu_custom_call.1} parent=39 // pred_check
          %p271 = pneg %p120
        $region50: #{tpu_custom_call.1} parent=39 // pred_check_branch
          %273 = sbr.rel (%p271) target = $region52
        $region51: #{tpu_custom_call.1} parent=39 // pred_region
          %275 = dma.done [#allocation4], 16
        $region52: #{tpu_custom_call.1} parent=39 // pred_fallthru
          _
        // Predicated region
        $region53: #{tpu_custom_call.1} parent=39 // pred_check
          %p276 = pneg %p141
        $region54: #{tpu_custom_call.1} parent=39 // pred_check_branch
          %278 = sbr.rel (%p276) target = $region56
        $region55: #{tpu_custom_call.1} parent=39 // pred_region
          %280 = dma.done [#allocation9], 16
        $region56: #{tpu_custom_call.1} parent=39 // pred_fallthru
          _
        %281 = sfence
        %s282 = sand.u32 %s44, 1
        %s283 = scalar_lea.sflag [#allocation3], %s282
        %s284 = sand.u32 %s44, 1
        %s285 = smul.addr %s284, 16
        %s286 = scalar_lea.vmem [#allocation2], %s285
        %p287 = pneg %p57
        %p288 = pneg %p54
        %p289 = pneg %p78
        %p290 = pneg %p75
        %p291 = pneg %p99
        %p292 = pneg %p96
        %p293 = pneg %p120
        %p294 = pneg %p117
        %p295 = pneg %p141
        %p296 = pneg %p138
        %p297 = pneg %p169
        %p298 = pneg %p166
        %p299 = scmp.lt.s32.totalorder %s26, 1
        %s300 = scalar_select %p299, %s26, 1
        %p301 = scmp.lt.s32.totalorder %s27, 2
        %s302 = scalar_select %p301, %s27, 2
        %s303 = smul.addr %s302, 114
        %s304 = smul.addr %s300, 342
        %s305 = sadd.s32 %s303, %s304
        %s306 = smul.addr %s305, 8
        %s307 = scalar_lea.vmem %s5, %s306
        %p308 = scmp.lt.s32.totalorder %s26, 1
        %s309 = scalar_select %p308, %s26, 1
        %p310 = scmp.lt.s32.totalorder %s27, 2
        %s311 = scalar_select %p310, %s27, 2
        %s312 = smul.addr %s311, 114
        %s313 = smul.addr %s309, 342
        %s314 = sadd.s32 %s312, %s313
        %s315 = smul.addr %s314, 8
        %s316 = scalar_lea.vmem %s5, %s315
        %v317 = vld [vmem:[%s260] sm:$0xff]
        %v318 = vld [vmem:[%s260 + $0x8] sm:$0xff]
        %v319 = vld [vmem:[%s1] sm:$0xff]
        %v320 = vld [vmem:[%s1 + $0x8] sm:$0xff]
        %v321 = vld [vmem:[%s1 + $0x10] sm:$0xff]
        %v322 = vld [vmem:[%s1 + $0x18] sm:$0xff]
        %v323 = vld [vmem:[%s1 + $0x20] sm:$0xff]
        %v324 = vld [vmem:[%s1 + $0x28] sm:$0xff]
        %v325 = vld [vmem:[%s1 + $0x30] sm:$0xff]
        %v326 = vld [vmem:[%s1 + $0x38] sm:$0xff]
        %v327 = vld [vmem:[%s1 + $0x40] sm:$0xff]
        %v328 = vld [vmem:[%s1 + $0x48] sm:$0xff]
        %v329 = vld [vmem:[%s1 + $0x50] sm:$0xff]
        %v330 = vld [vmem:[%s1 + $0x58] sm:$0xff]
        %v331 = vld [vmem:[%s1 + $0x60] sm:$0xff]
        %v332 = vld [vmem:[%s1 + $0x68] sm:$0xff]
        %v333 = vld [vmem:[%s1 + $0x70] sm:$0xff]
        %v334 = vld [vmem:[%s1 + $0x78] sm:$0xff]
        %v335 = vld [vmem:[%s1 + $0x80] sm:$0xff]
        %v336 = vld [vmem:[%s1 + $0x88] sm:$0xff]
        %v337 = vld [vmem:[%s1 + $0x90] sm:$0xff]
        %v338 = vld [vmem:[%s1 + $0x98] sm:$0xff]
        %v339 = vld [vmem:[%s1 + $0xa0] sm:$0xff]
        %v340 = vld [vmem:[%s1 + $0xa8] sm:$0xff]
        %v341 = vld [vmem:[%s1 + $0xb0] sm:$0xff]
        %v342 = vld [vmem:[%s1 + $0xb8] sm:$0xff]
        %v343 = vld [vmem:[%s1 + $0xc0] sm:$0xff]
        %v344 = vld [vmem:[%s1 + $0xc8] sm:$0xff]
        %v345 = vld [vmem:[%s1 + $0xd0] sm:$0xff]
        %v346 = vld [vmem:[%s1 + $0xd8] sm:$0xff]
        %v347 = vld [vmem:[%s1 + $0xe0] sm:$0xff]
        %v348 = vld [vmem:[%s1 + $0xe8] sm:$0xff]
        %v349 = vld [vmem:[%s1 + $0xf0] sm:$0xff]
        %v350 = vld [vmem:[%s1 + $0xf8] sm:$0xff]
        %v351 = vld [vmem:[%s1 + $0x100] sm:$0xff]
        %v352 = vld [vmem:[%s1 + $0x108] sm:$0xff]
        %v353 = vld [vmem:[%s1 + $0x110] sm:$0xff]
        %v354 = vld [vmem:[%s1 + $0x118] sm:$0xff]
        %v355 = vld [vmem:[%s1 + $0x120] sm:$0xff]
        %v356 = vld [vmem:[%s1 + $0x128] sm:$0x7]
        %vm357 = vcmask 130048
        %v359 = vsel %vm357, %v319, 0
        %v362 = vsel %vm357, %v320, 0
        %v365 = vsel %vm357, %v321, 0
        %v368 = vsel %vm357, %v322, 0
        %v371 = vsel %vm357, %v323, 0
        %v374 = vsel %vm357, %v324, 0
        %v377 = vsel %vm357, %v325, 0
        %v380 = vsel %vm357, %v326, 0
        %v383 = vsel %vm357, %v327, 0
        %v386 = vsel %vm357, %v328, 0
        %v389 = vsel %vm357, %v329, 0
        %v392 = vsel %vm357, %v330, 0
        %v395 = vsel %vm357, %v331, 0
        %v398 = vsel %vm357, %v332, 0
        %v401 = vsel %vm357, %v333, 0
        %v404 = vsel %vm357, %v334, 0
        %v407 = vsel %vm357, %v335, 0
        %v410 = vsel %vm357, %v336, 0
        %v413 = vsel %vm357, %v337, 0
        %v416 = vsel %vm357, %v338, 0
        %v419 = vsel %vm357, %v339, 0
        %v422 = vsel %vm357, %v340, 0
        %v425 = vsel %vm357, %v341, 0
        %v428 = vsel %vm357, %v342, 0
        %v431 = vsel %vm357, %v343, 0
        %v434 = vsel %vm357, %v344, 0
        %v437 = vsel %vm357, %v345, 0
        %v440 = vsel %vm357, %v346, 0
        %v443 = vsel %vm357, %v347, 0
        %v446 = vsel %vm357, %v348, 0
        %v449 = vsel %vm357, %v349, 0
        %v452 = vsel %vm357, %v350, 0
        %v455 = vsel %vm357, %v351, 0
        %v458 = vsel %vm357, %v352, 0
        %v461 = vsel %vm357, %v353, 0
        %v464 = vsel %vm357, %v354, 0
        %v467 = vsel %vm357, %v355, 0
        %v470 = vsel %vm357, %v356, 0
        %472 = vmatpush.msra.mxu0 0.0
        %473 = vmatpush.msra.mxu0 0.0
        %474 = vmatpush.msra.mxu0 0.0
        %475 = vmatpush.msra.mxu0 0.0
        %476 = vmatpush.msra.mxu0 0.0
        %477 = vmatpush.msra.mxu0 0.0
        %478 = vmatpush.msra.mxu0 0.0
        %479 = vmatpush.msra.mxu0 0.0
        %480 = vmatpush.msra.mxu0 0.0
        %481 = vmatpush.msra.mxu0 0.0
        %482 = vmatpush.msra.mxu0 0.0
        %483 = vmatpush.msra.mxu0 0.0
        %484 = vmatpush.msra.mxu0 0.0
        %485 = vmatpush.msra.mxu0 0.0
        %486 = vmatpush.msra.mxu0 %v318
        %487 = vmatpush.msra.mxu0 %v317
        %488 = vmatmul.f32.gmra.mxu0 %v359
        %v489 = vpop.f32.mrf.mxu0
        %v490 = vadd.f32 0.0, %v489
        %491 = vmatmul.f32.gmra.mxu0 %v362
        %v492 = vpop.f32.mrf.mxu0
        %v493 = vadd.f32 0.0, %v492
        %494 = vmatmul.f32.gmra.mxu0 %v365
        %v495 = vpop.f32.mrf.mxu0
        %v496 = vadd.f32 0.0, %v495
        %497 = vmatmul.f32.gmra.mxu0 %v368
        %v498 = vpop.f32.mrf.mxu0
        %v499 = vadd.f32 0.0, %v498
        %500 = vmatmul.f32.gmra.mxu0 %v371
        %v501 = vpop.f32.mrf.mxu0
        %v502 = vadd.f32 0.0, %v501
        %503 = vmatmul.f32.gmra.mxu0 %v374
        %v504 = vpop.f32.mrf.mxu0
        %v505 = vadd.f32 0.0, %v504
        %506 = vmatmul.f32.gmra.mxu0 %v377
        %v507 = vpop.f32.mrf.mxu0
        %v508 = vadd.f32 0.0, %v507
        %509 = vmatmul.f32.gmra.mxu0 %v380
        %v510 = vpop.f32.mrf.mxu0
        %v511 = vadd.f32 0.0, %v510
        %512 = vmatmul.f32.gmra.mxu0 %v383
        %v513 = vpop.f32.mrf.mxu0
        %v514 = vadd.f32 0.0, %v513
        %515 = vmatmul.f32.gmra.mxu0 %v386
        %v516 = vpop.f32.mrf.mxu0
        %v517 = vadd.f32 0.0, %v516
        %518 = vmatmul.f32.gmra.mxu0 %v389
        %v519 = vpop.f32.mrf.mxu0
        %v520 = vadd.f32 0.0, %v519
        %521 = vmatmul.f32.gmra.mxu0 %v392
        %v522 = vpop.f32.mrf.mxu0
        %v523 = vadd.f32 0.0, %v522
        %524 = vmatmul.f32.gmra.mxu0 %v395
        %v525 = vpop.f32.mrf.mxu0
        %v526 = vadd.f32 0.0, %v525
        %527 = vmatmul.f32.gmra.mxu0 %v398
        %v528 = vpop.f32.mrf.mxu0
        %v529 = vadd.f32 0.0, %v528
        %530 = vmatmul.f32.gmra.mxu0 %v401
        %v531 = vpop.f32.mrf.mxu0
        %v532 = vadd.f32 0.0, %v531
        %533 = vmatmul.f32.gmra.mxu0 %v404
        %v534 = vpop.f32.mrf.mxu0
        %v535 = vadd.f32 0.0, %v534
        %536 = vmatmul.f32.gmra.mxu0 %v407
        %v537 = vpop.f32.mrf.mxu0
        %v538 = vadd.f32 0.0, %v537
        %539 = vmatmul.f32.gmra.mxu0 %v410
        %v540 = vpop.f32.mrf.mxu0
        %v541 = vadd.f32 0.0, %v540
        %542 = vmatmul.f32.gmra.mxu0 %v413
        %v543 = vpop.f32.mrf.mxu0
        %v544 = vadd.f32 0.0, %v543
        %545 = vmatmul.f32.gmra.mxu0 %v416
        %v546 = vpop.f32.mrf.mxu0
        %v547 = vadd.f32 0.0, %v546
        %548 = vmatmul.f32.gmra.mxu0 %v419
        %v549 = vpop.f32.mrf.mxu0
        %v550 = vadd.f32 0.0, %v549
        %551 = vmatmul.f32.gmra.mxu0 %v422
        %v552 = vpop.f32.mrf.mxu0
        %v553 = vadd.f32 0.0, %v552
        %554 = vmatmul.f32.gmra.mxu0 %v425
        %v555 = vpop.f32.mrf.mxu0
        %v556 = vadd.f32 0.0, %v555
        %557 = vmatmul.f32.gmra.mxu0 %v428
        %v558 = vpop.f32.mrf.mxu0
        %v559 = vadd.f32 0.0, %v558
        %560 = vmatmul.f32.gmra.mxu0 %v431
        %v561 = vpop.f32.mrf.mxu0
        %v562 = vadd.f32 0.0, %v561
        %563 = vmatmul.f32.gmra.mxu0 %v434
        %v564 = vpop.f32.mrf.mxu0
        %v565 = vadd.f32 0.0, %v564
        %566 = vmatmul.f32.gmra.mxu0 %v437
        %v567 = vpop.f32.mrf.mxu0
        %v568 = vadd.f32 0.0, %v567
        %569 = vmatmul.f32.gmra.mxu0 %v440
        %v570 = vpop.f32.mrf.mxu0
        %v571 = vadd.f32 0.0, %v570
        %572 = vmatmul.f32.gmra.mxu0 %v443
        %v573 = vpop.f32.mrf.mxu0
        %v574 = vadd.f32 0.0, %v573
        %575 = vmatmul.f32.gmra.mxu0 %v446
        %v576 = vpop.f32.mrf.mxu0
        %v577 = vadd.f32 0.0, %v576
        %578 = vmatmul.f32.gmra.mxu0 %v449
        %v579 = vpop.f32.mrf.mxu0
        %v580 = vadd.f32 0.0, %v579
        %581 = vmatmul.f32.gmra.mxu0 %v452
        %v582 = vpop.f32.mrf.mxu0
        %v583 = vadd.f32 0.0, %v582
        %584 = vmatmul.f32.gmra.mxu0 %v455
        %v585 = vpop.f32.mrf.mxu0
        %v586 = vadd.f32 0.0, %v585
        %587 = vmatmul.f32.gmra.mxu0 %v458
        %v588 = vpop.f32.mrf.mxu0
        %v589 = vadd.f32 0.0, %v588
        %590 = vmatmul.f32.gmra.mxu0 %v461
        %v591 = vpop.f32.mrf.mxu0
        %v592 = vadd.f32 0.0, %v591
        %593 = vmatmul.f32.gmra.mxu0 %v464
        %v594 = vpop.f32.mrf.mxu0
        %v595 = vadd.f32 0.0, %v594
        %596 = vmatmul.f32.gmra.mxu0 %v467
        %v597 = vpop.f32.mrf.mxu0
        %v598 = vadd.f32 0.0, %v597
        %599 = vmatmul.f32.gmra.mxu0 %v470
        %v600 = vpop.f32.mrf.mxu0
        %v601 = vadd.f32 0.0, %v600
        %602 = vdwg.mxu0
        %v603 = vld [vmem:[#allocation5] sm:$0xff]
        %v604 = vld [vmem:[#allocation5 + $0x8] sm:$0xff]
        %v605 = vld [vmem:[#allocation5 + $0x10] sm:$0xff]
        %v606 = vld [vmem:[#allocation5 + $0x18] sm:$0xff]
        %v607 = vld [vmem:[#allocation5 + $0x20] sm:$0xff]
        %v608 = vld [vmem:[#allocation5 + $0x28] sm:$0xff]
        %v610 = vsel %vm357, %v490, 0
        %v613 = vsel %vm357, %v493, 0
        %v616 = vsel %vm357, %v496, 0
        %v619 = vsel %vm357, %v499, 0
        %v622 = vsel %vm357, %v502, 0
        %v625 = vsel %vm357, %v505, 0
        %v628 = vsel %vm357, %v508, 0
        %v631 = vsel %vm357, %v511, 0
        %v634 = vsel %vm357, %v514, 0
        %v637 = vsel %vm357, %v517, 0
        %v640 = vsel %vm357, %v520, 0
        %v643 = vsel %vm357, %v523, 0
        %v646 = vsel %vm357, %v526, 0
        %v649 = vsel %vm357, %v529, 0
        %v652 = vsel %vm357, %v532, 0
        %v655 = vsel %vm357, %v535, 0
        %v658 = vsel %vm357, %v538, 0
        %v661 = vsel %vm357, %v541, 0
        %v664 = vsel %vm357, %v544, 0
        %v667 = vsel %vm357, %v547, 0
        %v670 = vsel %vm357, %v550, 0
        %v673 = vsel %vm357, %v553, 0
        %v676 = vsel %vm357, %v556, 0
        %v679 = vsel %vm357, %v559, 0
        %v682 = vsel %vm357, %v562, 0
        %v685 = vsel %vm357, %v565, 0
        %v688 = vsel %vm357, %v568, 0
        %v691 = vsel %vm357, %v571, 0
        %v694 = vsel %vm357, %v574, 0
        %v697 = vsel %vm357, %v577, 0
        %v700 = vsel %vm357, %v580, 0
        %v703 = vsel %vm357, %v583, 0
        %v706 = vsel %vm357, %v586, 0
        %v709 = vsel %vm357, %v589, 0
        %v712 = vsel %vm357, %v592, 0
        %v715 = vsel %vm357, %v595, 0
        %v718 = vsel %vm357, %v598, 0
        %v721 = vsel %vm357, %v601, 0
        %723 = vmatpush.msra.mxu0 0.0
        %724 = vmatpush.msra.mxu0 0.0
        %725 = vmatpush.msra.mxu0 0.0
        %726 = vmatpush.msra.mxu0 0.0
        %727 = vmatpush.msra.mxu0 0.0
        %728 = vmatpush.msra.mxu0 0.0
        %729 = vmatpush.msra.mxu0 0.0
        %730 = vmatpush.msra.mxu0 0.0
        %731 = vmatpush.msra.mxu0 0.0
        %732 = vmatpush.msra.mxu0 0.0
        %733 = vmatpush.msra.mxu0 0.0
        %734 = vmatpush.msra.mxu0 0.0
        %735 = vmatpush.msra.mxu0 0.0
        %736 = vmatpush.msra.mxu0 0.0
        %737 = vmatpush.msra.mxu0 %v606
        %738 = vmatpush.msra.mxu0 %v603
        %739 = vmatmul.f32.gmra.mxu0 %v610
        %v740 = vpop.f32.mrf.mxu0
        %v741 = vadd.f32 0.0, %v740
        %742 = vmatmul.f32.gmra.mxu0 %v613
        %v743 = vpop.f32.mrf.mxu0
        %v744 = vadd.f32 0.0, %v743
        %745 = vmatmul.f32.gmra.mxu0 %v616
        %v746 = vpop.f32.mrf.mxu0
        %v747 = vadd.f32 0.0, %v746
        %748 = vmatmul.f32.gmra.mxu0 %v619
        %v749 = vpop.f32.mrf.mxu0
        %v750 = vadd.f32 0.0, %v749
        %751 = vmatmul.f32.gmra.mxu0 %v622
        %v752 = vpop.f32.mrf.mxu0
        %v753 = vadd.f32 0.0, %v752
        %754 = vmatmul.f32.gmra.mxu0 %v625
        %v755 = vpop.f32.mrf.mxu0
        %v756 = vadd.f32 0.0, %v755
        %757 = vmatmul.f32.gmra.mxu0 %v628
        %v758 = vpop.f32.mrf.mxu0
        %v759 = vadd.f32 0.0, %v758
        %760 = vmatmul.f32.gmra.mxu0 %v631
        %v761 = vpop.f32.mrf.mxu0
        %v762 = vadd.f32 0.0, %v761
        %763 = vmatmul.f32.gmra.mxu0 %v634
        %v764 = vpop.f32.mrf.mxu0
        %v765 = vadd.f32 0.0, %v764
        %766 = vmatmul.f32.gmra.mxu0 %v637
        %v767 = vpop.f32.mrf.mxu0
        %v768 = vadd.f32 0.0, %v767
        %769 = vmatmul.f32.gmra.mxu0 %v640
        %v770 = vpop.f32.mrf.mxu0
        %v771 = vadd.f32 0.0, %v770
        %772 = vmatmul.f32.gmra.mxu0 %v643
        %v773 = vpop.f32.mrf.mxu0
        %v774 = vadd.f32 0.0, %v773
        %775 = vmatmul.f32.gmra.mxu0 %v646
        %v776 = vpop.f32.mrf.mxu0
        %v777 = vadd.f32 0.0, %v776
        %778 = vmatmul.f32.gmra.mxu0 %v649
        %v779 = vpop.f32.mrf.mxu0
        %v780 = vadd.f32 0.0, %v779
        %781 = vmatmul.f32.gmra.mxu0 %v652
        %v782 = vpop.f32.mrf.mxu0
        %v783 = vadd.f32 0.0, %v782
        %784 = vmatmul.f32.gmra.mxu0 %v655
        %v785 = vpop.f32.mrf.mxu0
        %v786 = vadd.f32 0.0, %v785
        %787 = vmatmul.f32.gmra.mxu0 %v658
        %v788 = vpop.f32.mrf.mxu0
        %v789 = vadd.f32 0.0, %v788
        %790 = vmatmul.f32.gmra.mxu0 %v661
        %v791 = vpop.f32.mrf.mxu0
        %v792 = vadd.f32 0.0, %v791
        %793 = vmatmul.f32.gmra.mxu0 %v664
        %v794 = vpop.f32.mrf.mxu0
        %v795 = vadd.f32 0.0, %v794
        %796 = vmatmul.f32.gmra.mxu0 %v667
        %v797 = vpop.f32.mrf.mxu0
        %v798 = vadd.f32 0.0, %v797
        %799 = vmatmul.f32.gmra.mxu0 %v670
        %v800 = vpop.f32.mrf.mxu0
        %v801 = vadd.f32 0.0, %v800
        %802 = vmatmul.f32.gmra.mxu0 %v673
        %v803 = vpop.f32.mrf.mxu0
        %v804 = vadd.f32 0.0, %v803
        %805 = vmatmul.f32.gmra.mxu0 %v676
        %v806 = vpop.f32.mrf.mxu0
        %v807 = vadd.f32 0.0, %v806
        %808 = vmatmul.f32.gmra.mxu0 %v679
        %v809 = vpop.f32.mrf.mxu0
        %v810 = vadd.f32 0.0, %v809
        %811 = vmatmul.f32.gmra.mxu0 %v682
        %v812 = vpop.f32.mrf.mxu0
        %v813 = vadd.f32 0.0, %v812
        %814 = vmatmul.f32.gmra.mxu0 %v685
        %v815 = vpop.f32.mrf.mxu0
        %v816 = vadd.f32 0.0, %v815
        %817 = vmatmul.f32.gmra.mxu0 %v688
        %v818 = vpop.f32.mrf.mxu0
        %v819 = vadd.f32 0.0, %v818
        %820 = vmatmul.f32.gmra.mxu0 %v691
        %v821 = vpop.f32.mrf.mxu0
        %v822 = vadd.f32 0.0, %v821
        %823 = vmatmul.f32.gmra.mxu0 %v694
        %v824 = vpop.f32.mrf.mxu0
        %v825 = vadd.f32 0.0, %v824
        %826 = vmatmul.f32.gmra.mxu0 %v697
        %v827 = vpop.f32.mrf.mxu0
        %v828 = vadd.f32 0.0, %v827
        %829 = vmatmul.f32.gmra.mxu0 %v700
        %v830 = vpop.f32.mrf.mxu0
        %v831 = vadd.f32 0.0, %v830
        %832 = vmatmul.f32.gmra.mxu0 %v703
        %v833 = vpop.f32.mrf.mxu0
        %v834 = vadd.f32 0.0, %v833
        %835 = vmatmul.f32.gmra.mxu0 %v706
        %v836 = vpop.f32.mrf.mxu0
        %v837 = vadd.f32 0.0, %v836
        %838 = vmatmul.f32.gmra.mxu0 %v709
        %v839 = vpop.f32.mrf.mxu0
        %v840 = vadd.f32 0.0, %v839
        %841 = vmatmul.f32.gmra.mxu0 %v712
        %v842 = vpop.f32.mrf.mxu0
        %v843 = vadd.f32 0.0, %v842
        %844 = vmatmul.f32.gmra.mxu0 %v715
        %v845 = vpop.f32.mrf.mxu0
        %v846 = vadd.f32 0.0, %v845
        %847 = vmatmul.f32.gmra.mxu0 %v718
        %v848 = vpop.f32.mrf.mxu0
        %v849 = vadd.f32 0.0, %v848
        %850 = vmatmul.f32.gmra.mxu0 %v721
        %v851 = vpop.f32.mrf.mxu0
        %v852 = vadd.f32 0.0, %v851
        %853 = vdwg.mxu0
        %854 = vmatpush.msra.mxu0 0.0
        %855 = vmatpush.msra.mxu0 0.0
        %856 = vmatpush.msra.mxu0 0.0
        %857 = vmatpush.msra.mxu0 0.0
        %858 = vmatpush.msra.mxu0 0.0
        %859 = vmatpush.msra.mxu0 0.0
        %860 = vmatpush.msra.mxu0 0.0
        %861 = vmatpush.msra.mxu0 0.0
        %862 = vmatpush.msra.mxu0 0.0
        %863 = vmatpush.msra.mxu0 0.0
        %864 = vmatpush.msra.mxu0 0.0
        %865 = vmatpush.msra.mxu0 0.0
        %866 = vmatpush.msra.mxu0 0.0
        %867 = vmatpush.msra.mxu0 0.0
        %868 = vmatpush.msra.mxu0 %v607
        %869 = vmatpush.msra.mxu0 %v604
        %870 = vmatmul.f32.gmra.mxu0 %v610
        %v871 = vpop.f32.mrf.mxu0
        %v872 = vadd.f32 0.0, %v871
        %873 = vmatmul.f32.gmra.mxu0 %v613
        %v874 = vpop.f32.mrf.mxu0
        %v875 = vadd.f32 0.0, %v874
        %876 = vmatmul.f32.gmra.mxu0 %v616
        %v877 = vpop.f32.mrf.mxu0
        %v878 = vadd.f32 0.0, %v877
        %879 = vmatmul.f32.gmra.mxu0 %v619
        %v880 = vpop.f32.mrf.mxu0
        %v881 = vadd.f32 0.0, %v880
        %882 = vmatmul.f32.gmra.mxu0 %v622
        %v883 = vpop.f32.mrf.mxu0
        %v884 = vadd.f32 0.0, %v883
        %885 = vmatmul.f32.gmra.mxu0 %v625
        %v886 = vpop.f32.mrf.mxu0
        %v887 = vadd.f32 0.0, %v886
        %888 = vmatmul.f32.gmra.mxu0 %v628
        %v889 = vpop.f32.mrf.mxu0
        %v890 = vadd.f32 0.0, %v889
        %891 = vmatmul.f32.gmra.mxu0 %v631
        %v892 = vpop.f32.mrf.mxu0
        %v893 = vadd.f32 0.0, %v892
        %894 = vmatmul.f32.gmra.mxu0 %v634
        %v895 = vpop.f32.mrf.mxu0
        %v896 = vadd.f32 0.0, %v895
        %897 = vmatmul.f32.gmra.mxu0 %v637
        %v898 = vpop.f32.mrf.mxu0
        %v899 = vadd.f32 0.0, %v898
        %900 = vmatmul.f32.gmra.mxu0 %v640
        %v901 = vpop.f32.mrf.mxu0
        %v902 = vadd.f32 0.0, %v901
        %903 = vmatmul.f32.gmra.mxu0 %v643
        %v904 = vpop.f32.mrf.mxu0
        %v905 = vadd.f32 0.0, %v904
        %906 = vmatmul.f32.gmra.mxu0 %v646
        %v907 = vpop.f32.mrf.mxu0
        %v908 = vadd.f32 0.0, %v907
        %909 = vmatmul.f32.gmra.mxu0 %v649
        %v910 = vpop.f32.mrf.mxu0
        %v911 = vadd.f32 0.0, %v910
        %912 = vmatmul.f32.gmra.mxu0 %v652
        %v913 = vpop.f32.mrf.mxu0
        %v914 = vadd.f32 0.0, %v913
        %915 = vmatmul.f32.gmra.mxu0 %v655
        %v916 = vpop.f32.mrf.mxu0
        %v917 = vadd.f32 0.0, %v916
        %918 = vmatmul.f32.gmra.mxu0 %v658
        %v919 = vpop.f32.mrf.mxu0
        %v920 = vadd.f32 0.0, %v919
        %921 = vmatmul.f32.gmra.mxu0 %v661
        %v922 = vpop.f32.mrf.mxu0
        %v923 = vadd.f32 0.0, %v922
        %924 = vmatmul.f32.gmra.mxu0 %v664
        %v925 = vpop.f32.mrf.mxu0
        %v926 = vadd.f32 0.0, %v925
        %927 = vmatmul.f32.gmra.mxu0 %v667
        %v928 = vpop.f32.mrf.mxu0
        %v929 = vadd.f32 0.0, %v928
        %930 = vmatmul.f32.gmra.mxu0 %v670
        %v931 = vpop.f32.mrf.mxu0
        %v932 = vadd.f32 0.0, %v931
        %933 = vmatmul.f32.gmra.mxu0 %v673
        %v934 = vpop.f32.mrf.mxu0
        %v935 = vadd.f32 0.0, %v934
        %936 = vmatmul.f32.gmra.mxu0 %v676
        %v937 = vpop.f32.mrf.mxu0
        %v938 = vadd.f32 0.0, %v937
        %939 = vmatmul.f32.gmra.mxu0 %v679
        %v940 = vpop.f32.mrf.mxu0
        %v941 = vadd.f32 0.0, %v940
        %942 = vmatmul.f32.gmra.mxu0 %v682
        %v943 = vpop.f32.mrf.mxu0
        %v944 = vadd.f32 0.0, %v943
        %945 = vmatmul.f32.gmra.mxu0 %v685
        %v946 = vpop.f32.mrf.mxu0
        %v947 = vadd.f32 0.0, %v946
        %948 = vmatmul.f32.gmra.mxu0 %v688
        %v949 = vpop.f32.mrf.mxu0
        %v950 = vadd.f32 0.0, %v949
        %951 = vmatmul.f32.gmra.mxu0 %v691
        %v952 = vpop.f32.mrf.mxu0
        %v953 = vadd.f32 0.0, %v952
        %954 = vmatmul.f32.gmra.mxu0 %v694
        %v955 = vpop.f32.mrf.mxu0
        %v956 = vadd.f32 0.0, %v955
        %957 = vmatmul.f32.gmra.mxu0 %v697
        %v958 = vpop.f32.mrf.mxu0
        %v959 = vadd.f32 0.0, %v958
        %960 = vmatmul.f32.gmra.mxu0 %v700
        %v961 = vpop.f32.mrf.mxu0
        %v962 = vadd.f32 0.0, %v961
        %963 = vmatmul.f32.gmra.mxu0 %v703
        %v964 = vpop.f32.mrf.mxu0
        %v965 = vadd.f32 0.0, %v964
        %966 = vmatmul.f32.gmra.mxu0 %v706
        %v967 = vpop.f32.mrf.mxu0
        %v968 = vadd.f32 0.0, %v967
        %969 = vmatmul.f32.gmra.mxu0 %v709
        %v970 = vpop.f32.mrf.mxu0
        %v971 = vadd.f32 0.0, %v970
        %972 = vmatmul.f32.gmra.mxu0 %v712
        %v973 = vpop.f32.mrf.mxu0
        %v974 = vadd.f32 0.0, %v973
        %975 = vmatmul.f32.gmra.mxu0 %v715
        %v976 = vpop.f32.mrf.mxu0
        %v977 = vadd.f32 0.0, %v976
        %978 = vmatmul.f32.gmra.mxu0 %v718
        %v979 = vpop.f32.mrf.mxu0
        %v980 = vadd.f32 0.0, %v979
        %981 = vmatmul.f32.gmra.mxu0 %v721
        %v982 = vpop.f32.mrf.mxu0
        %v983 = vadd.f32 0.0, %v982
        %984 = vdwg.mxu0
        %985 = vmatpush.msra.mxu0 0.0
        %986 = vmatpush.msra.mxu0 0.0
        %987 = vmatpush.msra.mxu0 0.0
        %988 = vmatpush.msra.mxu0 0.0
        %989 = vmatpush.msra.mxu0 0.0
        %990 = vmatpush.msra.mxu0 0.0
        %991 = vmatpush.msra.mxu0 0.0
        %992 = vmatpush.msra.mxu0 0.0
        %993 = vmatpush.msra.mxu0 0.0
        %994 = vmatpush.msra.mxu0 0.0
        %995 = vmatpush.msra.mxu0 0.0
        %996 = vmatpush.msra.mxu0 0.0
        %997 = vmatpush.msra.mxu0 0.0
        %998 = vmatpush.msra.mxu0 0.0
        %999 = vmatpush.msra.mxu0 %v608
        %1000 = vmatpush.msra.mxu0 %v605
        %1001 = vmatmul.f32.gmra.mxu0 %v610
        %v1002 = vpop.f32.mrf.mxu0
        %v1003 = vadd.f32 0.0, %v1002
        %1004 = vmatmul.f32.gmra.mxu0 %v613
        %v1005 = vpop.f32.mrf.mxu0
        %v1006 = vadd.f32 0.0, %v1005
        %1007 = vmatmul.f32.gmra.mxu0 %v616
        %v1008 = vpop.f32.mrf.mxu0
        %v1009 = vadd.f32 0.0, %v1008
        %1010 = vmatmul.f32.gmra.mxu0 %v619
        %v1011 = vpop.f32.mrf.mxu0
        %v1012 = vadd.f32 0.0, %v1011
        %1013 = vmatmul.f32.gmra.mxu0 %v622
        %v1014 = vpop.f32.mrf.mxu0
        %v1015 = vadd.f32 0.0, %v1014
        %1016 = vmatmul.f32.gmra.mxu0 %v625
        %v1017 = vpop.f32.mrf.mxu0
        %v1018 = vadd.f32 0.0, %v1017
        %1019 = vmatmul.f32.gmra.mxu0 %v628
        %v1020 = vpop.f32.mrf.mxu0
        %v1021 = vadd.f32 0.0, %v1020
        %1022 = vmatmul.f32.gmra.mxu0 %v631
        %v1023 = vpop.f32.mrf.mxu0
        %v1024 = vadd.f32 0.0, %v1023
        %1025 = vmatmul.f32.gmra.mxu0 %v634
        %v1026 = vpop.f32.mrf.mxu0
        %v1027 = vadd.f32 0.0, %v1026
        %1028 = vmatmul.f32.gmra.mxu0 %v637
        %v1029 = vpop.f32.mrf.mxu0
        %v1030 = vadd.f32 0.0, %v1029
        %1031 = vmatmul.f32.gmra.mxu0 %v640
        %v1032 = vpop.f32.mrf.mxu0
        %v1033 = vadd.f32 0.0, %v1032
        %1034 = vmatmul.f32.gmra.mxu0 %v643
        %v1035 = vpop.f32.mrf.mxu0
        %v1036 = vadd.f32 0.0, %v1035
        %1037 = vmatmul.f32.gmra.mxu0 %v646
        %v1038 = vpop.f32.mrf.mxu0
        %v1039 = vadd.f32 0.0, %v1038
        %1040 = vmatmul.f32.gmra.mxu0 %v649
        %v1041 = vpop.f32.mrf.mxu0
        %v1042 = vadd.f32 0.0, %v1041
        %1043 = vmatmul.f32.gmra.mxu0 %v652
        %v1044 = vpop.f32.mrf.mxu0
        %v1045 = vadd.f32 0.0, %v1044
        %1046 = vmatmul.f32.gmra.mxu0 %v655
        %v1047 = vpop.f32.mrf.mxu0
        %v1048 = vadd.f32 0.0, %v1047
        %1049 = vmatmul.f32.gmra.mxu0 %v658
        %v1050 = vpop.f32.mrf.mxu0
        %v1051 = vadd.f32 0.0, %v1050
        %1052 = vmatmul.f32.gmra.mxu0 %v661
        %v1053 = vpop.f32.mrf.mxu0
        %v1054 = vadd.f32 0.0, %v1053
        %1055 = vmatmul.f32.gmra.mxu0 %v664
        %v1056 = vpop.f32.mrf.mxu0
        %v1057 = vadd.f32 0.0, %v1056
        %1058 = vmatmul.f32.gmra.mxu0 %v667
        %v1059 = vpop.f32.mrf.mxu0
        %v1060 = vadd.f32 0.0, %v1059
        %1061 = vmatmul.f32.gmra.mxu0 %v670
        %v1062 = vpop.f32.mrf.mxu0
        %v1063 = vadd.f32 0.0, %v1062
        %1064 = vmatmul.f32.gmra.mxu0 %v673
        %v1065 = vpop.f32.mrf.mxu0
        %v1066 = vadd.f32 0.0, %v1065
        %1067 = vmatmul.f32.gmra.mxu0 %v676
        %v1068 = vpop.f32.mrf.mxu0
        %v1069 = vadd.f32 0.0, %v1068
        %1070 = vmatmul.f32.gmra.mxu0 %v679
        %v1071 = vpop.f32.mrf.mxu0
        %v1072 = vadd.f32 0.0, %v1071
        %1073 = vmatmul.f32.gmra.mxu0 %v682
        %v1074 = vpop.f32.mrf.mxu0
        %v1075 = vadd.f32 0.0, %v1074
        %1076 = vmatmul.f32.gmra.mxu0 %v685
        %v1077 = vpop.f32.mrf.mxu0
        %v1078 = vadd.f32 0.0, %v1077
        %1079 = vmatmul.f32.gmra.mxu0 %v688
        %v1080 = vpop.f32.mrf.mxu0
        %v1081 = vadd.f32 0.0, %v1080
        %1082 = vmatmul.f32.gmra.mxu0 %v691
        %v1083 = vpop.f32.mrf.mxu0
        %v1084 = vadd.f32 0.0, %v1083
        %1085 = vmatmul.f32.gmra.mxu0 %v694
        %v1086 = vpop.f32.mrf.mxu0
        %v1087 = vadd.f32 0.0, %v1086
        %1088 = vmatmul.f32.gmra.mxu0 %v697
        %v1089 = vpop.f32.mrf.mxu0
        %v1090 = vadd.f32 0.0, %v1089
        %1091 = vmatmul.f32.gmra.mxu0 %v700
        %v1092 = vpop.f32.mrf.mxu0
        %v1093 = vadd.f32 0.0, %v1092
        %1094 = vmatmul.f32.gmra.mxu0 %v703
        %v1095 = vpop.f32.mrf.mxu0
        %v1096 = vadd.f32 0.0, %v1095
        %1097 = vmatmul.f32.gmra.mxu0 %v706
        %v1098 = vpop.f32.mrf.mxu0
        %v1099 = vadd.f32 0.0, %v1098
        %1100 = vmatmul.f32.gmra.mxu0 %v709
        %v1101 = vpop.f32.mrf.mxu0
        %v1102 = vadd.f32 0.0, %v1101
        %1103 = vmatmul.f32.gmra.mxu0 %v712
        %v1104 = vpop.f32.mrf.mxu0
        %v1105 = vadd.f32 0.0, %v1104
        %1106 = vmatmul.f32.gmra.mxu0 %v715
        %v1107 = vpop.f32.mrf.mxu0
        %v1108 = vadd.f32 0.0, %v1107
        %1109 = vmatmul.f32.gmra.mxu0 %v718
        %v1110 = vpop.f32.mrf.mxu0
        %v1111 = vadd.f32 0.0, %v1110
        %1112 = vmatmul.f32.gmra.mxu0 %v721
        %v1113 = vpop.f32.mrf.mxu0
        %v1114 = vadd.f32 0.0, %v1113
        %1115 = vdwg.mxu0
        %s1116 = sld [smem:[#allocation7 + %s27]]
        %v1117 = vstv %s1116
        %v1118 = vmul.f32 %v741, %v1117
        %v1119 = vmul.f32 %v872, %v1117
        %v1120 = vmul.f32 %v1003, %v1117
        %v1121 = vmul.f32 %v744, %v1117
        %v1122 = vmul.f32 %v875, %v1117
        %v1123 = vmul.f32 %v1006, %v1117
        %v1124 = vmul.f32 %v747, %v1117
        %v1125 = vmul.f32 %v878, %v1117
        %v1126 = vmul.f32 %v1009, %v1117
        %v1127 = vmul.f32 %v750, %v1117
        %v1128 = vmul.f32 %v881, %v1117
        %v1129 = vmul.f32 %v1012, %v1117
        %v1130 = vmul.f32 %v753, %v1117
        %v1131 = vmul.f32 %v884, %v1117
        %v1132 = vmul.f32 %v1015, %v1117
        %v1133 = vmul.f32 %v756, %v1117
        %v1134 = vmul.f32 %v887, %v1117
        %v1135 = vmul.f32 %v1018, %v1117
        %v1136 = vmul.f32 %v759, %v1117
        %v1137 = vmul.f32 %v890, %v1117
        %v1138 = vmul.f32 %v1021, %v1117
        %v1139 = vmul.f32 %v762, %v1117
        %v1140 = vmul.f32 %v893, %v1117
        %v1141 = vmul.f32 %v1024, %v1117
        %v1142 = vmul.f32 %v765, %v1117
        %v1143 = vmul.f32 %v896, %v1117
        %v1144 = vmul.f32 %v1027, %v1117
        %v1145 = vmul.f32 %v768, %v1117
        %v1146 = vmul.f32 %v899, %v1117
        %v1147 = vmul.f32 %v1030, %v1117
        %v1148 = vmul.f32 %v771, %v1117
        %v1149 = vmul.f32 %v902, %v1117
        %v1150 = vmul.f32 %v1033, %v1117
        %v1151 = vmul.f32 %v774, %v1117
        %v1152 = vmul.f32 %v905, %v1117
        %v1153 = vmul.f32 %v1036, %v1117
        %v1154 = vmul.f32 %v777, %v1117
        %v1155 = vmul.f32 %v908, %v1117
        %v1156 = vmul.f32 %v1039, %v1117
        %v1157 = vmul.f32 %v780, %v1117
        %v1158 = vmul.f32 %v911, %v1117
        %v1159 = vmul.f32 %v1042, %v1117
        %v1160 = vmul.f32 %v783, %v1117
        %v1161 = vmul.f32 %v914, %v1117
        %v1162 = vmul.f32 %v1045, %v1117
        %v1163 = vmul.f32 %v786, %v1117
        %v1164 = vmul.f32 %v917, %v1117
        %v1165 = vmul.f32 %v1048, %v1117
        %v1166 = vmul.f32 %v789, %v1117
        %v1167 = vmul.f32 %v920, %v1117
        %v1168 = vmul.f32 %v1051, %v1117
        %v1169 = vmul.f32 %v792, %v1117
        %v1170 = vmul.f32 %v923, %v1117
        %v1171 = vmul.f32 %v1054, %v1117
        %v1172 = vmul.f32 %v795, %v1117
        %v1173 = vmul.f32 %v926, %v1117
        %v1174 = vmul.f32 %v1057, %v1117
        %v1175 = vmul.f32 %v798, %v1117
        %v1176 = vmul.f32 %v929, %v1117
        %v1177 = vmul.f32 %v1060, %v1117
        %v1178 = vmul.f32 %v801, %v1117
        %v1179 = vmul.f32 %v932, %v1117
        %v1180 = vmul.f32 %v1063, %v1117
        %v1181 = vmul.f32 %v804, %v1117
        %v1182 = vmul.f32 %v935, %v1117
        %v1183 = vmul.f32 %v1066, %v1117
        %v1184 = vmul.f32 %v807, %v1117
        %v1185 = vmul.f32 %v938, %v1117
        %v1186 = vmul.f32 %v1069, %v1117
        %v1187 = vmul.f32 %v810, %v1117
        %v1188 = vmul.f32 %v941, %v1117
        %v1189 = vmul.f32 %v1072, %v1117
        %v1190 = vmul.f32 %v813, %v1117
        %v1191 = vmul.f32 %v944, %v1117
        %v1192 = vmul.f32 %v1075, %v1117
        %v1193 = vmul.f32 %v816, %v1117
        %v1194 = vmul.f32 %v947, %v1117
        %v1195 = vmul.f32 %v1078, %v1117
        %v1196 = vmul.f32 %v819, %v1117
        %v1197 = vmul.f32 %v950, %v1117
        %v1198 = vmul.f32 %v1081, %v1117
        %v1199 = vmul.f32 %v822, %v1117
        %v1200 = vmul.f32 %v953, %v1117
        %v1201 = vmul.f32 %v1084, %v1117
        %v1202 = vmul.f32 %v825, %v1117
        %v1203 = vmul.f32 %v956, %v1117
        %v1204 = vmul.f32 %v1087, %v1117
        %v1205 = vmul.f32 %v828, %v1117
        %v1206 = vmul.f32 %v959, %v1117
        %v1207 = vmul.f32 %v1090, %v1117
        %v1208 = vmul.f32 %v831, %v1117
        %v1209 = vmul.f32 %v962, %v1117
        %v1210 = vmul.f32 %v1093, %v1117
        %v1211 = vmul.f32 %v834, %v1117
        %v1212 = vmul.f32 %v965, %v1117
        %v1213 = vmul.f32 %v1096, %v1117
        %v1214 = vmul.f32 %v837, %v1117
        %v1215 = vmul.f32 %v968, %v1117
        %v1216 = vmul.f32 %v1099, %v1117
        %v1217 = vmul.f32 %v840, %v1117
        %v1218 = vmul.f32 %v971, %v1117
        %v1219 = vmul.f32 %v1102, %v1117
        %v1220 = vmul.f32 %v843, %v1117
        %v1221 = vmul.f32 %v974, %v1117
        %v1222 = vmul.f32 %v1105, %v1117
        %v1223 = vmul.f32 %v846, %v1117
        %v1224 = vmul.f32 %v977, %v1117
        %v1225 = vmul.f32 %v1108, %v1117
        %v1226 = vmul.f32 %v849, %v1117
        %v1227 = vmul.f32 %v980, %v1117
        %v1228 = vmul.f32 %v1111, %v1117
        %v1229 = vmul.f32 %v852, %v1117
        %v1230 = vmul.f32 %v983, %v1117
        %v1231 = vmul.f32 %v1114, %v1117
        %s1232 = sld [smem:[#allocation8 + %s27]]
        %v1233 = vstv %s1232
        %v1234 = vadd.f32 %v1118, %v1233
        %v1235 = vadd.f32 %v1119, %v1233
        %v1236 = vadd.f32 %v1120, %v1233
        %v1237 = vadd.f32 %v1121, %v1233
        %v1238 = vadd.f32 %v1122, %v1233
        %v1239 = vadd.f32 %v1123, %v1233
        %v1240 = vadd.f32 %v1124, %v1233
        %v1241 = vadd.f32 %v1125, %v1233
        %v1242 = vadd.f32 %v1126, %v1233
        %v1243 = vadd.f32 %v1127, %v1233
        %v1244 = vadd.f32 %v1128, %v1233
        %v1245 = vadd.f32 %v1129, %v1233
        %v1246 = vadd.f32 %v1130, %v1233
        %v1247 = vadd.f32 %v1131, %v1233
        %v1248 = vadd.f32 %v1132, %v1233
        %v1249 = vadd.f32 %v1133, %v1233
        %v1250 = vadd.f32 %v1134, %v1233
        %v1251 = vadd.f32 %v1135, %v1233
        %v1252 = vadd.f32 %v1136, %v1233
        %v1253 = vadd.f32 %v1137, %v1233
        %v1254 = vadd.f32 %v1138, %v1233
        %v1255 = vadd.f32 %v1139, %v1233
        %v1256 = vadd.f32 %v1140, %v1233
        %v1257 = vadd.f32 %v1141, %v1233
        %v1258 = vadd.f32 %v1142, %v1233
        %v1259 = vadd.f32 %v1143, %v1233
        %v1260 = vadd.f32 %v1144, %v1233
        %v1261 = vadd.f32 %v1145, %v1233
        %v1262 = vadd.f32 %v1146, %v1233
        %v1263 = vadd.f32 %v1147, %v1233
        %v1264 = vadd.f32 %v1148, %v1233
        %v1265 = vadd.f32 %v1149, %v1233
        %v1266 = vadd.f32 %v1150, %v1233
        %v1267 = vadd.f32 %v1151, %v1233
        %v1268 = vadd.f32 %v1152, %v1233
        %v1269 = vadd.f32 %v1153, %v1233
        %v1270 = vadd.f32 %v1154, %v1233
        %v1271 = vadd.f32 %v1155, %v1233
        %v1272 = vadd.f32 %v1156, %v1233
        %v1273 = vadd.f32 %v1157, %v1233
        %v1274 = vadd.f32 %v1158, %v1233
        %v1275 = vadd.f32 %v1159, %v1233
        %v1276 = vadd.f32 %v1160, %v1233
        %v1277 = vadd.f32 %v1161, %v1233
        %v1278 = vadd.f32 %v1162, %v1233
        %v1279 = vadd.f32 %v1163, %v1233
        %v1280 = vadd.f32 %v1164, %v1233
        %v1281 = vadd.f32 %v1165, %v1233
        %v1282 = vadd.f32 %v1166, %v1233
        %v1283 = vadd.f32 %v1167, %v1233
        %v1284 = vadd.f32 %v1168, %v1233
        %v1285 = vadd.f32 %v1169, %v1233
        %v1286 = vadd.f32 %v1170, %v1233
        %v1287 = vadd.f32 %v1171, %v1233
        %v1288 = vadd.f32 %v1172, %v1233
        %v1289 = vadd.f32 %v1173, %v1233
        %v1290 = vadd.f32 %v1174, %v1233
        %v1291 = vadd.f32 %v1175, %v1233
        %v1292 = vadd.f32 %v1176, %v1233
        %v1293 = vadd.f32 %v1177, %v1233
        %v1294 = vadd.f32 %v1178, %v1233
        %v1295 = vadd.f32 %v1179, %v1233
        %v1296 = vadd.f32 %v1180, %v1233
        %v1297 = vadd.f32 %v1181, %v1233
        %v1298 = vadd.f32 %v1182, %v1233
        %v1299 = vadd.f32 %v1183, %v1233
        %v1300 = vadd.f32 %v1184, %v1233
        %v1301 = vadd.f32 %v1185, %v1233
        %v1302 = vadd.f32 %v1186, %v1233
        %v1303 = vadd.f32 %v1187, %v1233
        %v1304 = vadd.f32 %v1188, %v1233
        %v1305 = vadd.f32 %v1189, %v1233
        %v1306 = vadd.f32 %v1190, %v1233
        %v1307 = vadd.f32 %v1191, %v1233
        %v1308 = vadd.f32 %v1192, %v1233
        %v1309 = vadd.f32 %v1193, %v1233
        %v1310 = vadd.f32 %v1194, %v1233
        %v1311 = vadd.f32 %v1195, %v1233
        %v1312 = vadd.f32 %v1196, %v1233
        %v1313 = vadd.f32 %v1197, %v1233
        %v1314 = vadd.f32 %v1198, %v1233
        %v1315 = vadd.f32 %v1199, %v1233
        %v1316 = vadd.f32 %v1200, %v1233
        %v1317 = vadd.f32 %v1201, %v1233
        %v1318 = vadd.f32 %v1202, %v1233
        %v1319 = vadd.f32 %v1203, %v1233
        %v1320 = vadd.f32 %v1204, %v1233
        %v1321 = vadd.f32 %v1205, %v1233
        %v1322 = vadd.f32 %v1206, %v1233
        %v1323 = vadd.f32 %v1207, %v1233
        %v1324 = vadd.f32 %v1208, %v1233
        %v1325 = vadd.f32 %v1209, %v1233
        %v1326 = vadd.f32 %v1210, %v1233
        %v1327 = vadd.f32 %v1211, %v1233
        %v1328 = vadd.f32 %v1212, %v1233
        %v1329 = vadd.f32 %v1213, %v1233
        %v1330 = vadd.f32 %v1214, %v1233
        %v1331 = vadd.f32 %v1215, %v1233
        %v1332 = vadd.f32 %v1216, %v1233
        %v1333 = vadd.f32 %v1217, %v1233
        %v1334 = vadd.f32 %v1218, %v1233
        %v1335 = vadd.f32 %v1219, %v1233
        %v1336 = vadd.f32 %v1220, %v1233
        %v1337 = vadd.f32 %v1221, %v1233
        %v1338 = vadd.f32 %v1222, %v1233
        %v1339 = vadd.f32 %v1223, %v1233
        %v1340 = vadd.f32 %v1224, %v1233
        %v1341 = vadd.f32 %v1225, %v1233
        %v1342 = vadd.f32 %v1226, %v1233
        %v1343 = vadd.f32 %v1227, %v1233
        %v1344 = vadd.f32 %v1228, %v1233
        %v1345 = vadd.f32 %v1229, %v1233
        %v1346 = vadd.f32 %v1230, %v1233
        %v1347 = vadd.f32 %v1231, %v1233
        %1348 = vst [vmem:[%s316] sm:$0xff] %v1234
        %1349 = vst [vmem:[%s316 + $0x8] sm:$0xff] %v1235
        %vm1350 = vcmask 351232
        %1351 = vst.msk [vmem:[%s316 + $0x10] sm:$0xff] %vm1350, %v1236
        %1352 = vst [vmem:[%s316 + $0x18] sm:$0xff] %v1237
        %1353 = vst [vmem:[%s316 + $0x20] sm:$0xff] %v1238
        %1354 = vst.msk [vmem:[%s316 + $0x28] sm:$0xff] %vm1350, %v1239
        %1355 = vst [vmem:[%s316 + $0x30] sm:$0xff] %v1240
        %1356 = vst [vmem:[%s316 + $0x38] sm:$0xff] %v1241
        %1357 = vst.msk [vmem:[%s316 + $0x40] sm:$0xff] %vm1350, %v1242
        %1358 = vst [vmem:[%s316 + $0x48] sm:$0xff] %v1243
        %1359 = vst [vmem:[%s316 + $0x50] sm:$0xff] %v1244
        %1360 = vst.msk [vmem:[%s316 + $0x58] sm:$0xff] %vm1350, %v1245
        %1361 = vst [vmem:[%s316 + $0x60] sm:$0xff] %v1246
        %1362 = vst [vmem:[%s316 + $0x68] sm:$0xff] %v1247
        %1363 = vst.msk [vmem:[%s316 + $0x70] sm:$0xff] %vm1350, %v1248
        %1364 = vst [vmem:[%s316 + $0x78] sm:$0xff] %v1249
        %1365 = vst [vmem:[%s316 + $0x80] sm:$0xff] %v1250
        %1366 = vst.msk [vmem:[%s316 + $0x88] sm:$0xff] %vm1350, %v1251
        %1367 = vst [vmem:[%s316 + $0x90] sm:$0xff] %v1252
        %1368 = vst [vmem:[%s316 + $0x98] sm:$0xff] %v1253
        %1369 = vst.msk [vmem:[%s316 + $0xa0] sm:$0xff] %vm1350, %v1254
        %1370 = vst [vmem:[%s316 + $0xa8] sm:$0xff] %v1255
        %1371 = vst [vmem:[%s316 + $0xb0] sm:$0xff] %v1256
        %1372 = vst.msk [vmem:[%s316 + $0xb8] sm:$0xff] %vm1350, %v1257
        %1373 = vst [vmem:[%s316 + $0xc0] sm:$0xff] %v1258
        %1374 = vst [vmem:[%s316 + $0xc8] sm:$0xff] %v1259
        %1375 = vst.msk [vmem:[%s316 + $0xd0] sm:$0xff] %vm1350, %v1260
        %1376 = vst [vmem:[%s316 + $0xd8] sm:$0xff] %v1261
        %1377 = vst [vmem:[%s316 + $0xe0] sm:$0xff] %v1262
        %1378 = vst.msk [vmem:[%s316 + $0xe8] sm:$0xff] %vm1350, %v1263
        %1379 = vst [vmem:[%s316 + $0xf0] sm:$0xff] %v1264
        %1380 = vst [vmem:[%s316 + $0xf8] sm:$0xff] %v1265
        %1381 = vst.msk [vmem:[%s316 + $0x100] sm:$0xff] %vm1350, %v1266
        %1382 = vst [vmem:[%s316 + $0x108] sm:$0xff] %v1267
        %1383 = vst [vmem:[%s316 + $0x110] sm:$0xff] %v1268
        %1384 = vst.msk [vmem:[%s316 + $0x118] sm:$0xff] %vm1350, %v1269
        %1385 = vst [vmem:[%s316 + $0x120] sm:$0xff] %v1270
        %1386 = vst [vmem:[%s316 + $0x128] sm:$0xff] %v1271
        %1387 = vst.msk [vmem:[%s316 + $0x130] sm:$0xff] %vm1350, %v1272
        %1388 = vst [vmem:[%s316 + $0x138] sm:$0xff] %v1273
        %1389 = vst [vmem:[%s316 + $0x140] sm:$0xff] %v1274
        %1390 = vst.msk [vmem:[%s316 + $0x148] sm:$0xff] %vm1350, %v1275
        %1391 = vst [vmem:[%s316 + $0x150] sm:$0xff] %v1276
        %1392 = vst [vmem:[%s316 + $0x158] sm:$0xff] %v1277
        %1393 = vst.msk [vmem:[%s316 + $0x160] sm:$0xff] %vm1350, %v1278
        %1394 = vst [vmem:[%s316 + $0x168] sm:$0xff] %v1279
        %1395 = vst [vmem:[%s316 + $0x170] sm:$0xff] %v1280
        %1396 = vst.msk [vmem:[%s316 + $0x178] sm:$0xff] %vm1350, %v1281
        %1397 = vst [vmem:[%s316 + $0x180] sm:$0xff] %v1282
        %1398 = vst [vmem:[%s316 + $0x188] sm:$0xff] %v1283
        %1399 = vst.msk [vmem:[%s316 + $0x190] sm:$0xff] %vm1350, %v1284
        %1400 = vst [vmem:[%s316 + $0x198] sm:$0xff] %v1285
        %1401 = vst [vmem:[%s316 + $0x1a0] sm:$0xff] %v1286
        %1402 = vst.msk [vmem:[%s316 + $0x1a8] sm:$0xff] %vm1350, %v1287
        %1403 = vst [vmem:[%s316 + $0x1b0] sm:$0xff] %v1288
        %1404 = vst [vmem:[%s316 + $0x1b8] sm:$0xff] %v1289
        %1405 = vst.msk [vmem:[%s316 + $0x1c0] sm:$0xff] %vm1350, %v1290
        %1406 = vst [vmem:[%s316 + $0x1c8] sm:$0xff] %v1291
        %1407 = vst [vmem:[%s316 + $0x1d0] sm:$0xff] %v1292
        %1408 = vst.msk [vmem:[%s316 + $0x1d8] sm:$0xff] %vm1350, %v1293
        %1409 = vst [vmem:[%s316 + $0x1e0] sm:$0xff] %v1294
        %1410 = vst [vmem:[%s316 + $0x1e8] sm:$0xff] %v1295
        %1411 = vst.msk [vmem:[%s316 + $0x1f0] sm:$0xff] %vm1350, %v1296
        %1412 = vst [vmem:[%s316 + $0x1f8] sm:$0xff] %v1297
        %1413 = vst [vmem:[%s316 + $0x200] sm:$0xff] %v1298
        %1414 = vst.msk [vmem:[%s316 + $0x208] sm:$0xff] %vm1350, %v1299
        %1415 = vst [vmem:[%s316 + $0x210] sm:$0xff] %v1300
        %1416 = vst [vmem:[%s316 + $0x218] sm:$0xff] %v1301
        %1417 = vst.msk [vmem:[%s316 + $0x220] sm:$0xff] %vm1350, %v1302
        %1418 = vst [vmem:[%s316 + $0x228] sm:$0xff] %v1303
        %1419 = vst [vmem:[%s316 + $0x230] sm:$0xff] %v1304
        %1420 = vst.msk [vmem:[%s316 + $0x238] sm:$0xff] %vm1350, %v1305
        %1421 = vst [vmem:[%s316 + $0x240] sm:$0xff] %v1306
        %1422 = vst [vmem:[%s316 + $0x248] sm:$0xff] %v1307
        %1423 = vst.msk [vmem:[%s316 + $0x250] sm:$0xff] %vm1350, %v1308
        %1424 = vst [vmem:[%s316 + $0x258] sm:$0xff] %v1309
        %1425 = vst [vmem:[%s316 + $0x260] sm:$0xff] %v1310
        %1426 = vst.msk [vmem:[%s316 + $0x268] sm:$0xff] %vm1350, %v1311
        %1427 = vst [vmem:[%s316 + $0x270] sm:$0xff] %v1312
        %1428 = vst [vmem:[%s316 + $0x278] sm:$0xff] %v1313
        %1429 = vst.msk [vmem:[%s316 + $0x280] sm:$0xff] %vm1350, %v1314
        %1430 = vst [vmem:[%s316 + $0x288] sm:$0xff] %v1315
        %1431 = vst [vmem:[%s316 + $0x290] sm:$0xff] %v1316
        %1432 = vst.msk [vmem:[%s316 + $0x298] sm:$0xff] %vm1350, %v1317
        %1433 = vst [vmem:[%s316 + $0x2a0] sm:$0xff] %v1318
        %1434 = vst [vmem:[%s316 + $0x2a8] sm:$0xff] %v1319
        %1435 = vst.msk [vmem:[%s316 + $0x2b0] sm:$0xff] %vm1350, %v1320
        %1436 = vst [vmem:[%s316 + $0x2b8] sm:$0xff] %v1321
        %1437 = vst [vmem:[%s316 + $0x2c0] sm:$0xff] %v1322
        %1438 = vst.msk [vmem:[%s316 + $0x2c8] sm:$0xff] %vm1350, %v1323
        %1439 = vst [vmem:[%s316 + $0x2d0] sm:$0xff] %v1324
        %1440 = vst [vmem:[%s316 + $0x2d8] sm:$0xff] %v1325
        %1441 = vst.msk [vmem:[%s316 + $0x2e0] sm:$0xff] %vm1350, %v1326
        %1442 = vst [vmem:[%s316 + $0x2e8] sm:$0xff] %v1327
        %1443 = vst [vmem:[%s316 + $0x2f0] sm:$0xff] %v1328
        %1444 = vst.msk [vmem:[%s316 + $0x2f8] sm:$0xff] %vm1350, %v1329
        %1445 = vst [vmem:[%s316 + $0x300] sm:$0xff] %v1330
        %1446 = vst [vmem:[%s316 + $0x308] sm:$0xff] %v1331
        %1447 = vst.msk [vmem:[%s316 + $0x310] sm:$0xff] %vm1350, %v1332
        %1448 = vst [vmem:[%s316 + $0x318] sm:$0xff] %v1333
        %1449 = vst [vmem:[%s316 + $0x320] sm:$0xff] %v1334
        %1450 = vst.msk [vmem:[%s316 + $0x328] sm:$0xff] %vm1350, %v1335
        %1451 = vst [vmem:[%s316 + $0x330] sm:$0xff] %v1336
        %1452 = vst [vmem:[%s316 + $0x338] sm:$0xff] %v1337
        %1453 = vst.msk [vmem:[%s316 + $0x340] sm:$0xff] %vm1350, %v1338
        %1454 = vst [vmem:[%s316 + $0x348] sm:$0xff] %v1339
        %1455 = vst [vmem:[%s316 + $0x350] sm:$0xff] %v1340
        %1456 = vst.msk [vmem:[%s316 + $0x358] sm:$0xff] %vm1350, %v1341
        %1457 = vst [vmem:[%s316 + $0x360] sm:$0xff] %v1342
        %1458 = vst [vmem:[%s316 + $0x368] sm:$0xff] %v1343
        %1459 = vst.msk [vmem:[%s316 + $0x370] sm:$0xff] %vm1350, %v1344
        %1460 = vst [vmem:[%s316 + $0x378] sm:$0x7] %v1345
        %1461 = vst [vmem:[%s316 + $0x380] sm:$0x7] %v1346
        %vm1462 = vcmask 346112
        %1463 = vst.msk [vmem:[%s316 + $0x388] sm:$0x7] %vm1462, %v1347
        %p1464 = scmp.lt.s32.totalorder %s26, 1
        %s1465 = scalar_select %p1464, %s26, 1
        %p1466 = scmp.lt.s32.totalorder %s27, 2
        %s1467 = scalar_select %p1466, %s27, 2
        %s1468 = smul.addr %s1467, 114
        %s1469 = smul.addr %s1465, 342
        %s1470 = sadd.s32 %s1468, %s1469
        %s1471 = smul.addr %s1470, 8
        %s1472 = scalar_lea.vmem %s5, %s1471
        // Predicated region
        $region57: #{tpu_custom_call.1} parent=39 // pred_check
          %p1473 = pneg %p166
        $region58: #{tpu_custom_call.1} parent=39 // pred_check_branch
          %1475 = sbr.rel (%p1473) target = $region60
        $region59: #{tpu_custom_call.1} parent=39 // pred_region
          _
        $region60: #{tpu_custom_call.1} parent=39 // pred_fallthru
          _
      $region40: #{tpu_custom_call.1} parent=5 // pred_fallthru
        _
      %p1476 = scmp.le.s32.totalorder 2, %s17
      // Predicated region
      $region61: #{tpu_custom_call.1} parent=5 // pred_check
        %p1477 = pneg %p1476
      $region62: #{tpu_custom_call.1} parent=5 // pred_check_branch
        %1479 = sbr.rel (%p1477) target = $region64
      $region63: #{tpu_custom_call.1} parent=5 // pred_region
        %s1480 = ssub.s32 %s17, 2
        // Predicated region
        $region65: #{tpu_custom_call.1} parent=63 // pred_check
          %p1481 = pneg %p172
        $region66: #{tpu_custom_call.1} parent=63 // pred_check_branch
          %1483 = sbr.rel (%p1481) target = $region68
        $region67: #{tpu_custom_call.1} parent=63 // pred_region
          %p1484 = scmp.lt.s32.totalorder %s28, 1
          %s1485 = scalar_select %p1484, %s28, 1
          %p1486 = scmp.lt.s32.totalorder %s29, 2
          %s1487 = scalar_select %p1486, %s29, 2
          %s1488 = smul.addr %s1487, 114
          %s1489 = smul.addr %s1485, 342
          %s1490 = sadd.s32 %s1488, %s1489
          %s1491 = smul.addr %s1490, 8
          %s1492 = scalar_lea.vmem %s5, %s1491
        $region68: #{tpu_custom_call.1} parent=63 // pred_fallthru
          _
      $region64: #{tpu_custom_call.1} parent=5 // pred_fallthru
        _
    $region6: #{tpu_custom_call.1} parent=1 // loop_footer
      %s21 = sadd.s32 1, %s17
    $region7: #{tpu_custom_call.1} parent=1 // loop_footer_branch
      %16 = sbr.rel target = $region3
    $region8: #{tpu_custom_call.1} parent=1 // loop_exit
      _
    %1493 = vsyncpa [#allocation3], 1
    %s1494 = scalar_lea.sflag [#allocation3], 1
    %1495 = vsyncpa %s1494, 1
    %1496 = vsyncpa [#allocation6], 1
    %1497 = vsyncpa [#allocation4], 1
    %s1498 = scalar_lea.sflag [#allocation4], 1
    %1499 = vsyncpa %s1498, 1
    %1500 = vsyncpa [#allocation9], 1

</llo_original>
